<compile_context>
chip_gen: v6e
topology: v6e:2x2x1
jax: 0.10.0
libtpu: 0.0.40
codegen_flags: <defaults>
</compile_context>

<pallas_src>
import jax
import jax.numpy as jnp
import numpy as np
from jax.experimental import pallas as pl
from jax.experimental.pallas import tpu as pltpu


# ----------------------------------------------------------------------------
# Fused WRM eval kernel: single grid step, everything VMEM resident.
# ----------------------------------------------------------------------------
def _wrm_fused_kernel(gp_ref, pp_ref,
                      wgbb_ref, bgbb_ref, wpbb_ref, bpbb_ref,
                      ug_ref, up_ref, c0_ref,
                      o_ref):
    gp = gp_ref[...]                     # (B, 3)    pooled global channels
    pp = pp_ref[...]                     # (P, B, 3) pooled patch channels

    # Backbone stubs (3 -> 2048 affine heads). K=3 is far too small for the
    # MXU, so these are VPU broadcast-MACs.
    # TODO(synk): real global_feature / patch_feature trunks would replace
    # these; the folded head below is strictly downstream of them.
    g_feat = (bgbb_ref[...]
              + gp[:, 0:1] * wgbb_ref[0:1, :]
              + gp[:, 1:2] * wgbb_ref[1:2, :]
              + gp[:, 2:3] * wgbb_ref[2:3, :])                  # (B, 2048)
    p_feat = (bpbb_ref[...]
              + pp[:, :, 0:1] * wpbb_ref[0:1, :]
              + pp[:, :, 1:2] * wpbb_ref[1:2, :]
              + pp[:, :, 2:3] * wpbb_ref[2:3, :])               # (P, B, 2048)

    # Fully-folded affine head (projection_*_fc -> score_fc1 -> score_fc2):
    #   score = g_feat . u_g + sum_j p_feat_j . u_p[j] + c0
    acc = g_feat * ug_ref[...]                                  # (B, 2048)
    acc = acc + jnp.sum(p_feat * up_ref[...], axis=0)           # (B, 2048)
    score = jnp.sum(acc, axis=-1, keepdims=True) + c0_ref[...]  # (B, 1)

    # (B, 1) output store is a masked partial vst; negligible with one grid
    # step — switch to a lane-padded slab if B grows / a grid axis is added.
    o_ref[...] = score.astype(o_ref.dtype)


def _full_spec(shape):
    nd = len(shape)
    return pl.BlockSpec(tuple(shape), lambda i: (0,) * nd)


def wrm_fused_pallas(gp, pp, p):
    """gp: (B, 3) pooled global; pp: (P, B, 3) pooled patches (patch-major)."""
    B = gp.shape[0]
    args = (gp, pp,
            p["wgbb"], p["bgbb"], p["wpbb"], p["bpbb"],
            p["u_g"], p["u_p"], p["c0"])
    in_specs = [_full_spec(a.shape) for a in args]
    return pl.pallas_call(
        _wrm_fused_kernel,
        out_shape=jax.ShapeDtypeStruct((B, 1), jnp.float32),
        grid_spec=pltpu.PrefetchScalarGridSpec(
            num_scalar_prefetch=0,
            grid=(1,),                       # single step; all operands resident
            in_specs=in_specs,
            out_specs=pl.BlockSpec((B, 1), lambda i: (0, 0)),
        ),
        compiler_params=pltpu.CompilerParams(
            dimension_semantics=("arbitrary",),
            vmem_limit_bytes=32 * 1024 * 1024,   # safe on v5e/v6e/v7x; usage ~0.25 MiB
        ),
    )(*args)


# ----------------------------------------------------------------------------
# Parameter construction (deterministic, synthetic) + offline affine fold.
# ----------------------------------------------------------------------------
def _init_linear(key, in_dim, out_dim, scale=0.02):
    kw, kb = jax.random.split(key)
    w = scale * jax.random.normal(kw, (in_dim, out_dim), jnp.float32)
    b = scale * jax.random.normal(kb, (out_dim,), jnp.float32)
    return w, b


def make_wrm_params(key):
    keys = jax.random.split(key, 6)
    return {
        # Backbone stubs (external modules in PyTorch): GAP + 3->2048 head.
        "global_feature": _init_linear(keys[0], 3, 2048),
        "patch_feature": _init_linear(keys[1], 3, 2048),
        # WRM's own layers used by the eval forward:
        "projection_global_fc": _init_linear(keys[2], 2048, 512),
        "projection_patch_fc": _init_linear(keys[3], 2048, 512),
        "score_fc1": _init_linear(keys[4], 512 * 6, 256),
        "score_fc2": _init_linear(keys[5], 256, 1),
    }


def prepare_wrm_params(params):
    """One-time offline fold of the affine eval head (all in f32).

    score = concat([g_proj, p_proj_0..p_proj_{P-1}]) @ W1 @ w2 + (b1 @ w2 + b2)
    with g_proj = g_feat @ Wpg + bpg, p_proj_j = p_feat_j @ Wpp + bpp, so
    score = g_feat @ u_g + sum_j p_feat_j @ u_p[j] + c0.
    """
    f32 = jnp.float32
    wgbb, bgbb = params["global_feature"]
    wpbb, bpbb = params["patch_feature"]
    wpg, bpg = params["projection_global_fc"]          # (2048, 512), (512,)
    wpp, bpp = params["projection_patch_fc"]           # (2048, 512), (512,)
    w1, b1 = params["score_fc1"]                       # (3072, 256), (256,)
    w2, b2 = params["score_fc2"]                       # (256, 1),   (1,)

    d_proj = wpg.shape[1]                              # 512
    n_blk = w1.shape[0] // d_proj                      # 6 = global + 5 patches
    n_patches = n_blk - 1

    w1_blk = w1.astype(f32).reshape(n_blk, d_proj, -1)       # (6, 512, 256)
    v = jnp.einsum("jdh,ho->jdo", w1_blk, w2.astype(f32))    # (6, 512, 1)

    u_g = (wpg.astype(f32) @ v[0]).reshape(1, -1)            # (1, 2048)
    u_p = jnp.stack(
        [(wpp.astype(f32) @ v[j + 1]).reshape(-1) for j in range(n_patches)]
    )[:, None, :]                                            # (P, 1, 2048)

    c0 = (bpg.astype(f32) @ v[0]
          + bpp.astype(f32) @ jnp.sum(v[1:], axis=0)
          + b1.astype(f32) @ w2.astype(f32)
          + b2.astype(f32)).reshape(1, 1)                    # (1, 1)

    return dict(
        wgbb=wgbb.astype(f32),
        bgbb=bgbb.reshape(1, -1).astype(f32),
        wpbb=wpbb.astype(f32),
        bpbb=bpbb.reshape(1, -1).astype(f32),
        u_g=u_g.astype(f32),
        u_p=u_p.astype(f32),
        c0=c0.astype(f32),
    )


# ----------------------------------------------------------------------------
# WRM inference forward (self.training == False branch).
# ----------------------------------------------------------------------------
def wrm_forward_eval(prepped, x_global, x_patch):
    """
    x_global: (B, 3, H, W)     NCHW
    x_patch : (B, P, 3, H, W)  NCHW per patch (P = 5 -> 512*6 score input)
    returns : (B, 1) score
    """
    # Plain-JAX glue: the backbone-stub pooling only (feature reduction).
    gp = jnp.mean(x_global, axis=(2, 3))             # (B, 3)
    pp = jnp.mean(x_patch, axis=(3, 4))               # (B, P, 3)
    pp = jnp.transpose(pp, (1, 0, 2))                  # (P, B, 3), patch-major
    return wrm_fused_pallas(gp, pp, prepped)


# Pure-JAX reference mirroring the torch eval forward (projection -> concat ->
# fc1 -> fc2), entirely in f32 from the RAW (unfolded) parameters, so it also
# validates that the offline fold is exact.
def wrm_reference(params, x_global, x_patch):
    wgbb, bgbb = params["global_feature"]
    wpbb, bpbb = params["patch_feature"]
    wpg, bpg = params["projection_global_fc"]
    wpp, bpp = params["projection_patch_fc"]
    w1, b1 = params["score_fc1"]
    w2, b2 = params["score_fc2"]

    B, P = x_patch.shape[0], x_patch.shape[1]
    gp = jnp.mean(x_global, axis=(2, 3))                       # (B, 3)
    pf = jnp.mean(x_patch, axis=(3, 4)).reshape(B * P, 3)      # (B*P, 3)

    g = gp @ wgbb + bgbb                                       # backbone stub
    g = g @ wpg + bpg                                          # (B, 512)
    q = pf @ wpbb + bpbb
    q = q @ wpp + bpp                                          # (B*P, 512)
    concat = jnp.concatenate(
        [g.reshape(B, 1, -1), q.reshape(B, P, -1)], axis=1).reshape(B, -1)
    h = concat @ w1 + b1
    return h @ w2 + b2                                         # (B, 1)


# ----------------------------------------------------------------------------
if __name__ == "__main__":
    key = jax.random.PRNGKey(0)
    k_params, k_g, k_p = jax.random.split(key, 3)

    params = make_wrm_params(k_params)
    prepped = prepare_wrm_params(params)

    B, P, H, W = 2, 5, 16, 16
    x_global = jax.random.normal(k_g, (B, 3, H, W), jnp.float32)
    x_patch = jax.random.normal(k_p, (B, P, 3, H, W), jnp.float32)

    fwd = jax.jit(wrm_forward_eval)
    score = fwd(prepped, x_global, x_patch)
    score = jax.block_until_ready(score)

    assert score.shape == (B, 1) and score.dtype == jnp.float32
    assert bool(jnp.all(jnp.isfinite(score)))

    ref = jax.block_until_ready(wrm_reference(params, x_global, x_patch))
    np.testing.assert_allclose(np.asarray(score), np.asarray(ref),
                               rtol=1e-3, atol=1e-5)

    print("KERNEL_OK")
</pallas_src>

<mosaic_0001>
module attributes {stable_mosaic.version = 11 : i64} {
  func.func @_wrm_fused_kernel(%arg0: i32, %arg1: memref<2x3xf32, #tpu.memory_space<vmem>>, %arg2: memref<5x2x3xf32, #tpu.memory_space<vmem>>, %arg3: memref<3x2048xf32, #tpu.memory_space<vmem>>, %arg4: memref<1x2048xf32, #tpu.memory_space<vmem>>, %arg5: memref<3x2048xf32, #tpu.memory_space<vmem>>, %arg6: memref<1x2048xf32, #tpu.memory_space<vmem>>, %arg7: memref<1x2048xf32, #tpu.memory_space<vmem>>, %arg8: memref<5x1x2048xf32, #tpu.memory_space<vmem>>, %arg9: memref<1x1xf32, #tpu.memory_space<vmem>>, %arg10: memref<2x1xf32, #tpu.memory_space<vmem>>) attributes {dimension_semantics = [#tpu.dimension_semantics<arbitrary>], iteration_bounds = array<i64: 1>, scalar_prefetch = 0 : i64, scratch_operands = 0 : i64, tpu.core_type = #tpu.core_type<tc>, window_params = [{pipeline_mode = #tpu.pipeline_mode<synchronous>, transform_indices = @transform_0, window_bounds = array<i64: 2, 3>}, {pipeline_mode = #tpu.pipeline_mode<synchronous>, transform_indices = @transform_1, window_bounds = array<i64: 5, 2, 3>}, {pipeline_mode = #tpu.pipeline_mode<synchronous>, transform_indices = @transform_2, window_bounds = array<i64: 3, 2048>}, {pipeline_mode = #tpu.pipeline_mode<synchronous>, transform_indices = @transform_3, window_bounds = array<i64: 1, 2048>}, {pipeline_mode = #tpu.pipeline_mode<synchronous>, transform_indices = @transform_4, window_bounds = array<i64: 3, 2048>}, {pipeline_mode = #tpu.pipeline_mode<synchronous>, transform_indices = @transform_5, window_bounds = array<i64: 1, 2048>}, {pipeline_mode = #tpu.pipeline_mode<synchronous>, transform_indices = @transform_6, window_bounds = array<i64: 1, 2048>}, {pipeline_mode = #tpu.pipeline_mode<synchronous>, transform_indices = @transform_7, window_bounds = array<i64: 5, 1, 2048>}, {pipeline_mode = #tpu.pipeline_mode<synchronous>, transform_indices = @transform_8, window_bounds = array<i64: 1, 1>}, {pipeline_mode = #tpu.pipeline_mode<synchronous>, transform_indices = @transform_9, window_bounds = array<i64: 2, 1>}]} {
    %c0 = arith.constant 0 : index
    %c0_0 = arith.constant 0 : index
    %0 = vector.load %arg1[%c0, %c0_0] : memref<2x3xf32, #tpu.memory_space<vmem>>, vector<2x3xf32>
    %c0_1 = arith.constant 0 : index
    %c0_2 = arith.constant 0 : index
    %c0_3 = arith.constant 0 : index
    %1 = vector.load %arg2[%c0_1, %c0_2, %c0_3] : memref<5x2x3xf32, #tpu.memory_space<vmem>>, vector<5x2x3xf32>
    %c0_4 = arith.constant 0 : index
    %c0_5 = arith.constant 0 : index
    %2 = vector.load %arg4[%c0_4, %c0_5] : memref<1x2048xf32, #tpu.memory_space<vmem>>, vector<1x2048xf32>
    %3 = vector.extract_strided_slice %0 {offsets = [0, 0], sizes = [2, 1], strides = [1, 1]} : vector<2x3xf32> to vector<2x1xf32>
    %c0_6 = arith.constant 0 : index
    %c0_7 = arith.constant 0 : index
    %4 = vector.load %arg3[%c0_6, %c0_7] : memref<3x2048xf32, #tpu.memory_space<vmem>>, vector<1x2048xf32>
    %5 = vector.broadcast %3 : vector<2x1xf32> to vector<2x2048xf32>
    %6 = vector.broadcast %4 : vector<1x2048xf32> to vector<2x2048xf32>
    %7 = arith.mulf %5, %6 : vector<2x2048xf32>
    %8 = vector.broadcast %2 : vector<1x2048xf32> to vector<2x2048xf32>
    %9 = arith.addf %8, %7 : vector<2x2048xf32>
    %10 = vector.extract_strided_slice %0 {offsets = [0, 1], sizes = [2, 1], strides = [1, 1]} : vector<2x3xf32> to vector<2x1xf32>
    %c1 = arith.constant 1 : index
    %c0_8 = arith.constant 0 : index
    %11 = vector.load %arg3[%c1, %c0_8] : memref<3x2048xf32, #tpu.memory_space<vmem>>, vector<1x2048xf32>
    %12 = vector.broadcast %10 : vector<2x1xf32> to vector<2x2048xf32>
    %13 = vector.broadcast %11 : vector<1x2048xf32> to vector<2x2048xf32>
    %14 = arith.mulf %12, %13 : vector<2x2048xf32>
    %15 = arith.addf %9, %14 : vector<2x2048xf32>
    %16 = vector.extract_strided_slice %0 {offsets = [0, 2], sizes = [2, 1], strides = [1, 1]} : vector<2x3xf32> to vector<2x1xf32>
    %c2 = arith.constant 2 : index
    %c0_9 = arith.constant 0 : index
    %17 = vector.load %arg3[%c2, %c0_9] : memref<3x2048xf32, #tpu.memory_space<vmem>>, vector<1x2048xf32>
    %18 = vector.broadcast %16 : vector<2x1xf32> to vector<2x2048xf32>
    %19 = vector.broadcast %17 : vector<1x2048xf32> to vector<2x2048xf32>
    %20 = arith.mulf %18, %19 : vector<2x2048xf32>
    %21 = arith.addf %15, %20 : vector<2x2048xf32>
    %c0_10 = arith.constant 0 : index
    %c0_11 = arith.constant 0 : index
    %22 = vector.load %arg6[%c0_10, %c0_11] : memref<1x2048xf32, #tpu.memory_space<vmem>>, vector<1x2048xf32>
    %23 = vector.extract_strided_slice %1 {offsets = [0, 0, 0], sizes = [5, 2, 1], strides = [1, 1, 1]} : vector<5x2x3xf32> to vector<5x2x1xf32>
    %c0_12 = arith.constant 0 : index
    %c0_13 = arith.constant 0 : index
    %24 = vector.load %arg5[%c0_12, %c0_13] : memref<3x2048xf32, #tpu.memory_space<vmem>>, vector<1x2048xf32>
    %25 = vector.shape_cast %24 : vector<1x2048xf32> to vector<1x1x2048xf32>
    %26 = vector.broadcast %23 : vector<5x2x1xf32> to vector<5x2x2048xf32>
    %27 = vector.broadcast %25 : vector<1x1x2048xf32> to vector<5x2x2048xf32>
    %28 = arith.mulf %26, %27 : vector<5x2x2048xf32>
    %29 = vector.shape_cast %22 : vector<1x2048xf32> to vector<1x1x2048xf32>
    %30 = vector.broadcast %29 : vector<1x1x2048xf32> to vector<5x2x2048xf32>
    %31 = arith.addf %30, %28 : vector<5x2x2048xf32>
    %32 = vector.extract_strided_slice %1 {offsets = [0, 0, 1], sizes = [5, 2, 1], strides = [1, 1, 1]} : vector<5x2x3xf32> to vector<5x2x1xf32>
    %c1_14 = arith.constant 1 : index
    %c0_15 = arith.constant 0 : index
    %33 = vector.load %arg5[%c1_14, %c0_15] : memref<3x2048xf32, #tpu.memory_space<vmem>>, vector<1x2048xf32>
    %34 = vector.shape_cast %33 : vector<1x2048xf32> to vector<1x1x2048xf32>
    %35 = vector.broadcast %32 : vector<5x2x1xf32> to vector<5x2x2048xf32>
    %36 = vector.broadcast %34 : vector<1x1x2048xf32> to vector<5x2x2048xf32>
    %37 = arith.mulf %35, %36 : vector<5x2x2048xf32>
    %38 = arith.addf %31, %37 : vector<5x2x2048xf32>
    %39 = vector.extract_strided_slice %1 {offsets = [0, 0, 2], sizes = [5, 2, 1], strides = [1, 1, 1]} : vector<5x2x3xf32> to vector<5x2x1xf32>
    %c2_16 = arith.constant 2 : index
    %c0_17 = arith.constant 0 : index
    %40 = vector.load %arg5[%c2_16, %c0_17] : memref<3x2048xf32, #tpu.memory_space<vmem>>, vector<1x2048xf32>
    %41 = vector.shape_cast %40 : vector<1x2048xf32> to vector<1x1x2048xf32>
    %42 = vector.broadcast %39 : vector<5x2x1xf32> to vector<5x2x2048xf32>
    %43 = vector.broadcast %41 : vector<1x1x2048xf32> to vector<5x2x2048xf32>
    %44 = arith.mulf %42, %43 : vector<5x2x2048xf32>
    %45 = arith.addf %38, %44 : vector<5x2x2048xf32>
    %c0_18 = arith.constant 0 : index
    %c0_19 = arith.constant 0 : index
    %46 = vector.load %arg7[%c0_18, %c0_19] : memref<1x2048xf32, #tpu.memory_space<vmem>>, vector<1x2048xf32>
    %47 = vector.broadcast %46 : vector<1x2048xf32> to vector<2x2048xf32>
    %48 = arith.mulf %21, %47 : vector<2x2048xf32>
    %c0_20 = arith.constant 0 : index
    %c0_21 = arith.constant 0 : index
    %c0_22 = arith.constant 0 : index
    %49 = vector.load %arg8[%c0_20, %c0_21, %c0_22] : memref<5x1x2048xf32, #tpu.memory_space<vmem>>, vector<5x1x2048xf32>
    %50 = vector.broadcast %49 : vector<5x1x2048xf32> to vector<5x2x2048xf32>
    %51 = arith.mulf %45, %50 : vector<5x2x2048xf32>
    %cst = arith.constant dense<0.000000e+00> : vector<2x2048xf32>
    %52 = vector.multi_reduction <add>, %51, %cst [0] : vector<5x2x2048xf32> to vector<2x2048xf32>
    %53 = arith.addf %48, %52 : vector<2x2048xf32>
    %cst_23 = arith.constant dense<0.000000e+00> : vector<2xf32>
    %54 = vector.multi_reduction <add>, %53, %cst_23 [1] : vector<2x2048xf32> to vector<2xf32>
    %55 = vector.shape_cast %54 : vector<2xf32> to vector<2x1xf32>
    %c0_24 = arith.constant 0 : index
    %c0_25 = arith.constant 0 : index
    %56 = vector.load %arg9[%c0_24, %c0_25] : memref<1x1xf32, #tpu.memory_space<vmem>>, vector<1x1xf32>
    %57 = vector.broadcast %56 : vector<1x1xf32> to vector<2x1xf32>
    %58 = arith.addf %55, %57 : vector<2x1xf32>
    %c0_26 = arith.constant 0 : index
    %c0_27 = arith.constant 0 : index
    %59 = vector.load %arg10[%c0_26, %c0_27] : memref<2x1xf32, #tpu.memory_space<vmem>>, vector<2x1xf32>
    tpu.vector_store %arg10[%c0_26, %c0_27], %58 {strides = array<i32>} : memref<2x1xf32, #tpu.memory_space<vmem>>, vector<2x1xf32>,
    return
  }
  func.func @transform_0(%arg0: i32) -> (i32, i32) {
    %c0_i32 = arith.constant 0 : i32
    %c0_i32_0 = arith.constant 0 : i32
    %c0_i32_1 = arith.constant 0 : i32
    return %c0_i32, %c0_i32_0 : i32, i32
  }
  func.func @transform_1(%arg0: i32) -> (i32, i32, i32) {
    %c0_i32 = arith.constant 0 : i32
    %c0_i32_0 = arith.constant 0 : i32
    %c0_i32_1 = arith.constant 0 : i32
    %c0_i32_2 = arith.constant 0 : i32
    return %c0_i32, %c0_i32_0, %c0_i32_1 : i32, i32, i32
  }
  func.func @transform_2(%arg0: i32) -> (i32, i32) {
    %c0_i32 = arith.constant 0 : i32
    %c0_i32_0 = arith.constant 0 : i32
    %c0_i32_1 = arith.constant 0 : i32
    return %c0_i32, %c0_i32_0 : i32, i32
  }
  func.func @transform_3(%arg0: i32) -> (i32, i32) {
    %c0_i32 = arith.constant 0 : i32
    %c0_i32_0 = arith.constant 0 : i32
    %c0_i32_1 = arith.constant 0 : i32
    return %c0_i32, %c0_i32_0 : i32, i32
  }
  func.func @transform_4(%arg0: i32) -> (i32, i32) {
    %c0_i32 = arith.constant 0 : i32
    %c0_i32_0 = arith.constant 0 : i32
    %c0_i32_1 = arith.constant 0 : i32
    return %c0_i32, %c0_i32_0 : i32, i32
  }
  func.func @transform_5(%arg0: i32) -> (i32, i32) {
    %c0_i32 = arith.constant 0 : i32
    %c0_i32_0 = arith.constant 0 : i32
    %c0_i32_1 = arith.constant 0 : i32
    return %c0_i32, %c0_i32_0 : i32, i32
  }
  func.func @transform_6(%arg0: i32) -> (i32, i32) {
    %c0_i32 = arith.constant 0 : i32
    %c0_i32_0 = arith.constant 0 : i32
    %c0_i32_1 = arith.constant 0 : i32
    return %c0_i32, %c0_i32_0 : i32, i32
  }
  func.func @transform_7(%arg0: i32) -> (i32, i32, i32) {
    %c0_i32 = arith.constant 0 : i32
    %c0_i32_0 = arith.constant 0 : i32
    %c0_i32_1 = arith.constant 0 : i32
    %c0_i32_2 = arith.constant 0 : i32
    return %c0_i32, %c0_i32_0, %c0_i32_1 : i32, i32, i32
  }
  func.func @transform_8(%arg0: i32) -> (i32, i32) {
    %c0_i32 = arith.constant 0 : i32
    %c0_i32_0 = arith.constant 0 : i32
    %c0_i32_1 = arith.constant 0 : i32
    return %c0_i32, %c0_i32_0 : i32, i32
  }
  func.func @transform_9(%arg0: i32) -> (i32, i32) {
    %c0_i32 = arith.constant 0 : i32
    %c0_i32_0 = arith.constant 0 : i32
    %c0_i32_1 = arith.constant 0 : i32
    return %c0_i32, %c0_i32_0 : i32, i32
  }
}

</mosaic_0001>

<llo_original>
// kernel: wrm_forward_eval.1
$region0: #{wrm_forward_eval.1}
  #allocation0 [shape = 'u32[]', space=smem, size = 0x4, offset = 0x4, fixed_abs, tag = 'smem constant byte address 0x4 - core index']
  #allocation1 [shape = 'u32[144,128]{1,0:T(1,128)}', space=vmem, size = 0x12000, scoped, tag = 'internal scratch']
  #allocation2 [shape = 'f32[1,1]{1,0:T(1,128)S(1)}', space=vmem, size = 0x200, scoped, tag = 'scoped memory for wrm_forward_eval.1']
  %s0 = inlined_call_operand.vmem [shape: f32[2,3], index: 0, kind: input, shape index: {}]
  %s1 = inlined_call_operand.vmem [shape: f32[5,2,3], index: 1, kind: input, shape index: {}]
  %s2 = inlined_call_operand.vmem [shape: f32[3,2048], index: 2, kind: input, shape index: {}]
  %s3 = inlined_call_operand.vmem [shape: f32[1,2048], index: 3, kind: input, shape index: {}]
  %s4 = inlined_call_operand.vmem [shape: f32[3,2048], index: 4, kind: input, shape index: {}]
  %s5 = inlined_call_operand.vmem [shape: f32[1,2048], index: 5, kind: input, shape index: {}]
  %s6 = inlined_call_operand.vmem [shape: f32[1,2048], index: 6, kind: input, shape index: {}]
  %s7 = inlined_call_operand.vmem [shape: f32[5,1,2048], index: 7, kind: input, shape index: {}]
  %s8 = inlined_call_operand.<no memory space> [shape: f32[1,1], index: 8, kind: input, shape index: {}]
  %s9 = inlined_call_operand.vmem [shape: f32[2,1], index: 9, kind: output, shape index: {}]
  %s10 = sld [smem:[#allocation0]]
  $region46: #{wrm_forward_eval.1} parent=0
    _
  %s12 = ssub.s32 1, %s10
  %s13 = scalar_select 0, %s12, %s10
  %v14 = vstv %s8
  %15 = vst [vmem:[#allocation2] sm:$0x1] %v14
  // Predicated region
  $region2: #{wrm_forward_eval.1} parent=0 // pred_check
    _
  $region3: #{wrm_forward_eval.1} parent=0 // pred_check_branch
    %17 = sbr.rel (0) target = $region5
  $region4: #{wrm_forward_eval.1} parent=0 // pred_region
    _
  $region5: #{wrm_forward_eval.1} parent=0 // pred_fallthru
    _
  // Predicated region
  $region6: #{wrm_forward_eval.1} parent=0 // pred_check
    _
  $region7: #{wrm_forward_eval.1} parent=0 // pred_check_branch
    %19 = sbr.rel (0) target = $region9
  $region8: #{wrm_forward_eval.1} parent=0 // pred_region
    _
  $region9: #{wrm_forward_eval.1} parent=0 // pred_fallthru
    _
  // Predicated region
  $region10: #{wrm_forward_eval.1} parent=0 // pred_check
    _
  $region11: #{wrm_forward_eval.1} parent=0 // pred_check_branch
    %21 = sbr.rel (0) target = $region13
  $region12: #{wrm_forward_eval.1} parent=0 // pred_region
    _
  $region13: #{wrm_forward_eval.1} parent=0 // pred_fallthru
    _
  // Predicated region
  $region14: #{wrm_forward_eval.1} parent=0 // pred_check
    _
  $region15: #{wrm_forward_eval.1} parent=0 // pred_check_branch
    %23 = sbr.rel (0) target = $region17
  $region16: #{wrm_forward_eval.1} parent=0 // pred_region
    _
  $region17: #{wrm_forward_eval.1} parent=0 // pred_fallthru
    _
  // Predicated region
  $region18: #{wrm_forward_eval.1} parent=0 // pred_check
    _
  $region19: #{wrm_forward_eval.1} parent=0 // pred_check_branch
    %25 = sbr.rel (0) target = $region21
  $region20: #{wrm_forward_eval.1} parent=0 // pred_region
    _
  $region21: #{wrm_forward_eval.1} parent=0 // pred_fallthru
    _
  // Predicated region
  $region22: #{wrm_forward_eval.1} parent=0 // pred_check
    _
  $region23: #{wrm_forward_eval.1} parent=0 // pred_check_branch
    %27 = sbr.rel (0) target = $region25
  $region24: #{wrm_forward_eval.1} parent=0 // pred_region
    _
  $region25: #{wrm_forward_eval.1} parent=0 // pred_fallthru
    _
  // Predicated region
  $region26: #{wrm_forward_eval.1} parent=0 // pred_check
    _
  $region27: #{wrm_forward_eval.1} parent=0 // pred_check_branch
    %29 = sbr.rel (0) target = $region29
  $region28: #{wrm_forward_eval.1} parent=0 // pred_region
    _
  $region29: #{wrm_forward_eval.1} parent=0 // pred_fallthru
    _
  // Predicated region
  $region30: #{wrm_forward_eval.1} parent=0 // pred_check
    _
  $region31: #{wrm_forward_eval.1} parent=0 // pred_check_branch
    %31 = sbr.rel (0) target = $region33
  $region32: #{wrm_forward_eval.1} parent=0 // pred_region
    _
  $region33: #{wrm_forward_eval.1} parent=0 // pred_fallthru
    _
  // Predicated region
  $region34: #{wrm_forward_eval.1} parent=0 // pred_check
    _
  $region35: #{wrm_forward_eval.1} parent=0 // pred_check_branch
    %33 = sbr.rel (0) target = $region37
  $region36: #{wrm_forward_eval.1} parent=0 // pred_region
    _
  $region37: #{wrm_forward_eval.1} parent=0 // pred_fallthru
    _
  %v34 = vld [vmem:[%s0] sm:$0x3]
  %v35 = vld [vmem:[%s1] sm:$0x3]
  %v36 = vld [vmem:[%s1 + $0x2] sm:$0x3]
  %v37 = vld [vmem:[%s1 + $0x4] sm:$0x3]
  %v38 = vld [vmem:[%s1 + $0x6] sm:$0x3]
  %v39 = vld [vmem:[%s1 + $0x8] sm:$0x3]
  %v40 = vld [vmem:[%s3] sm:$0xff]
  %v41 = vld [vmem:[%s3 + $0x8] sm:$0xff]
  %v42 = vld [vmem:[%s2] ss:$4 sm:$0xff]
  %s43 = scalar_lea.vmem %s2, 32
  %v44 = vld [vmem:[%s43] ss:$4 sm:$0xff]
  %46 = vset.pattern.permute.xlu0 0
  %47 = vperm.xlu0 %46, %v34
  %v48 = vpop.permute.xlu0 %47
  %v52 = vlaneseq
  %v53 = vshrl.u32 %v52, 7
  %v54 = vsub.s32 0, %v53
  %v55 = vrot.slane %v42, %v54
  %v56 = vlaneseq
  %v57 = vshrl.u32 %v56, 7
  %v58 = vsub.s32 1, %v57
  %v59 = vrot.slane %v42, %v58
  %v60 = vlaneseq
  %v61 = vshrl.u32 %v60, 7
  %v62 = vsub.s32 2, %v61
  %v63 = vrot.slane %v42, %v62
  %v64 = vlaneseq
  %v65 = vshrl.u32 %v64, 7
  %v66 = vsub.s32 3, %v65
  %v67 = vrot.slane %v42, %v66
  %v68 = vlaneseq
  %v69 = vshrl.u32 %v68, 7
  %v70 = vsub.s32 4, %v69
  %v71 = vrot.slane %v42, %v70
  %v72 = vlaneseq
  %v73 = vshrl.u32 %v72, 7
  %v74 = vsub.s32 5, %v73
  %v75 = vrot.slane %v42, %v74
  %v76 = vlaneseq
  %v77 = vshrl.u32 %v76, 7
  %v78 = vsub.s32 6, %v77
  %v79 = vrot.slane %v42, %v78
  %v80 = vlaneseq
  %v81 = vshrl.u32 %v80, 7
  %v82 = vsub.s32 7, %v81
  %v83 = vrot.slane %v42, %v82
  %v84 = vlaneseq
  %v85 = vshrl.u32 %v84, 7
  %v86 = vsub.s32 0, %v85
  %v87 = vrot.slane %v44, %v86
  %v88 = vlaneseq
  %v89 = vshrl.u32 %v88, 7
  %v90 = vsub.s32 1, %v89
  %v91 = vrot.slane %v44, %v90
  %v92 = vlaneseq
  %v93 = vshrl.u32 %v92, 7
  %v94 = vsub.s32 2, %v93
  %v95 = vrot.slane %v44, %v94
  %v96 = vlaneseq
  %v97 = vshrl.u32 %v96, 7
  %v98 = vsub.s32 3, %v97
  %v99 = vrot.slane %v44, %v98
  %v100 = vlaneseq
  %v101 = vshrl.u32 %v100, 7
  %v102 = vsub.s32 4, %v101
  %v103 = vrot.slane %v44, %v102
  %v104 = vlaneseq
  %v105 = vshrl.u32 %v104, 7
  %v106 = vsub.s32 5, %v105
  %v107 = vrot.slane %v44, %v106
  %v108 = vlaneseq
  %v109 = vshrl.u32 %v108, 7
  %v110 = vsub.s32 6, %v109
  %v111 = vrot.slane %v44, %v110
  %v112 = vlaneseq
  %v113 = vshrl.u32 %v112, 7
  %v114 = vsub.s32 7, %v113
  %v115 = vrot.slane %v44, %v114
  %v132 = vmul.f32 %v48, %v55
  %v133 = vmul.f32 %v48, %v59
  %v134 = vmul.f32 %v48, %v63
  %v135 = vmul.f32 %v48, %v67
  %v136 = vmul.f32 %v48, %v71
  %v137 = vmul.f32 %v48, %v75
  %v138 = vmul.f32 %v48, %v79
  %v139 = vmul.f32 %v48, %v83
  %v140 = vmul.f32 %v48, %v87
  %v141 = vmul.f32 %v48, %v91
  %v142 = vmul.f32 %v48, %v95
  %v143 = vmul.f32 %v48, %v99
  %v144 = vmul.f32 %v48, %v103
  %v145 = vmul.f32 %v48, %v107
  %v146 = vmul.f32 %v48, %v111
  %v147 = vmul.f32 %v48, %v115
  %v150 = vlaneseq
  %v151 = vshrl.u32 %v150, 7
  %v152 = vsub.s32 0, %v151
  %v153 = vrot.slane %v40, %v152
  %v154 = vlaneseq
  %v155 = vshrl.u32 %v154, 7
  %v156 = vsub.s32 1, %v155
  %v157 = vrot.slane %v40, %v156
  %v158 = vlaneseq
  %v159 = vshrl.u32 %v158, 7
  %v160 = vsub.s32 2, %v159
  %v161 = vrot.slane %v40, %v160
  %v162 = vlaneseq
  %v163 = vshrl.u32 %v162, 7
  %v164 = vsub.s32 3, %v163
  %v165 = vrot.slane %v40, %v164
  %v166 = vlaneseq
  %v167 = vshrl.u32 %v166, 7
  %v168 = vsub.s32 4, %v167
  %v169 = vrot.slane %v40, %v168
  %v170 = vlaneseq
  %v171 = vshrl.u32 %v170, 7
  %v172 = vsub.s32 5, %v171
  %v173 = vrot.slane %v40, %v172
  %v174 = vlaneseq
  %v175 = vshrl.u32 %v174, 7
  %v176 = vsub.s32 6, %v175
  %v177 = vrot.slane %v40, %v176
  %v178 = vlaneseq
  %v179 = vshrl.u32 %v178, 7
  %v180 = vsub.s32 7, %v179
  %v181 = vrot.slane %v40, %v180
  %v182 = vlaneseq
  %v183 = vshrl.u32 %v182, 7
  %v184 = vsub.s32 0, %v183
  %v185 = vrot.slane %v41, %v184
  %v186 = vlaneseq
  %v187 = vshrl.u32 %v186, 7
  %v188 = vsub.s32 1, %v187
  %v189 = vrot.slane %v41, %v188
  %v190 = vlaneseq
  %v191 = vshrl.u32 %v190, 7
  %v192 = vsub.s32 2, %v191
  %v193 = vrot.slane %v41, %v192
  %v194 = vlaneseq
  %v195 = vshrl.u32 %v194, 7
  %v196 = vsub.s32 3, %v195
  %v197 = vrot.slane %v41, %v196
  %v198 = vlaneseq
  %v199 = vshrl.u32 %v198, 7
  %v200 = vsub.s32 4, %v199
  %v201 = vrot.slane %v41, %v200
  %v202 = vlaneseq
  %v203 = vshrl.u32 %v202, 7
  %v204 = vsub.s32 5, %v203
  %v205 = vrot.slane %v41, %v204
  %v206 = vlaneseq
  %v207 = vshrl.u32 %v206, 7
  %v208 = vsub.s32 6, %v207
  %v209 = vrot.slane %v41, %v208
  %v210 = vlaneseq
  %v211 = vshrl.u32 %v210, 7
  %v212 = vsub.s32 7, %v211
  %v213 = vrot.slane %v41, %v212
  %v230 = vadd.f32 %v153, %v132
  %v231 = vadd.f32 %v157, %v133
  %v232 = vadd.f32 %v161, %v134
  %v233 = vadd.f32 %v165, %v135
  %v234 = vadd.f32 %v169, %v136
  %v235 = vadd.f32 %v173, %v137
  %v236 = vadd.f32 %v177, %v138
  %v237 = vadd.f32 %v181, %v139
  %v238 = vadd.f32 %v185, %v140
  %v239 = vadd.f32 %v189, %v141
  %v240 = vadd.f32 %v193, %v142
  %v241 = vadd.f32 %v197, %v143
  %v242 = vadd.f32 %v201, %v144
  %v243 = vadd.f32 %v205, %v145
  %v244 = vadd.f32 %v209, %v146
  %v245 = vadd.f32 %v213, %v147
  %s246 = scalar_lea.vmem %s2, 1
  %v247 = vld [vmem:[%s246] ss:$4 sm:$0xff]
  %s248 = scalar_lea.vmem %s2, 33
  %v249 = vld [vmem:[%s248] ss:$4 sm:$0xff]
  %250 = vset.pattern.permute.xlu0 1
  %251 = vperm.xlu0 %250, %v34
  %v252 = vpop.permute.xlu0 %251
  %v256 = vlaneseq
  %v257 = vshrl.u32 %v256, 7
  %v258 = vsub.s32 0, %v257
  %v259 = vrot.slane %v247, %v258
  %v260 = vlaneseq
  %v261 = vshrl.u32 %v260, 7
  %v262 = vsub.s32 1, %v261
  %v263 = vrot.slane %v247, %v262
  %v264 = vlaneseq
  %v265 = vshrl.u32 %v264, 7
  %v266 = vsub.s32 2, %v265
  %v267 = vrot.slane %v247, %v266
  %v268 = vlaneseq
  %v269 = vshrl.u32 %v268, 7
  %v270 = vsub.s32 3, %v269
  %v271 = vrot.slane %v247, %v270
  %v272 = vlaneseq
  %v273 = vshrl.u32 %v272, 7
  %v274 = vsub.s32 4, %v273
  %v275 = vrot.slane %v247, %v274
  %v276 = vlaneseq
  %v277 = vshrl.u32 %v276, 7
  %v278 = vsub.s32 5, %v277
  %v279 = vrot.slane %v247, %v278
  %v280 = vlaneseq
  %v281 = vshrl.u32 %v280, 7
  %v282 = vsub.s32 6, %v281
  %v283 = vrot.slane %v247, %v282
  %v284 = vlaneseq
  %v285 = vshrl.u32 %v284, 7
  %v286 = vsub.s32 7, %v285
  %v287 = vrot.slane %v247, %v286
  %v288 = vlaneseq
  %v289 = vshrl.u32 %v288, 7
  %v290 = vsub.s32 0, %v289
  %v291 = vrot.slane %v249, %v290
  %v292 = vlaneseq
  %v293 = vshrl.u32 %v292, 7
  %v294 = vsub.s32 1, %v293
  %v295 = vrot.slane %v249, %v294
  %v296 = vlaneseq
  %v297 = vshrl.u32 %v296, 7
  %v298 = vsub.s32 2, %v297
  %v299 = vrot.slane %v249, %v298
  %v300 = vlaneseq
  %v301 = vshrl.u32 %v300, 7
  %v302 = vsub.s32 3, %v301
  %v303 = vrot.slane %v249, %v302
  %v304 = vlaneseq
  %v305 = vshrl.u32 %v304, 7
  %v306 = vsub.s32 4, %v305
  %v307 = vrot.slane %v249, %v306
  %v308 = vlaneseq
  %v309 = vshrl.u32 %v308, 7
  %v310 = vsub.s32 5, %v309
  %v311 = vrot.slane %v249, %v310
  %v312 = vlaneseq
  %v313 = vshrl.u32 %v312, 7
  %v314 = vsub.s32 6, %v313
  %v315 = vrot.slane %v249, %v314
  %v316 = vlaneseq
  %v317 = vshrl.u32 %v316, 7
  %v318 = vsub.s32 7, %v317
  %v319 = vrot.slane %v249, %v318
  %v336 = vmul.f32 %v252, %v259
  %v337 = vmul.f32 %v252, %v263
  %v338 = vmul.f32 %v252, %v267
  %v339 = vmul.f32 %v252, %v271
  %v340 = vmul.f32 %v252, %v275
  %v341 = vmul.f32 %v252, %v279
  %v342 = vmul.f32 %v252, %v283
  %v343 = vmul.f32 %v252, %v287
  %v344 = vmul.f32 %v252, %v291
  %v345 = vmul.f32 %v252, %v295
  %v346 = vmul.f32 %v252, %v299
  %v347 = vmul.f32 %v252, %v303
  %v348 = vmul.f32 %v252, %v307
  %v349 = vmul.f32 %v252, %v311
  %v350 = vmul.f32 %v252, %v315
  %v351 = vmul.f32 %v252, %v319
  %v352 = vadd.f32 %v230, %v336
  %v353 = vadd.f32 %v231, %v337
  %v354 = vadd.f32 %v232, %v338
  %v355 = vadd.f32 %v233, %v339
  %v356 = vadd.f32 %v234, %v340
  %v357 = vadd.f32 %v235, %v341
  %v358 = vadd.f32 %v236, %v342
  %v359 = vadd.f32 %v237, %v343
  %v360 = vadd.f32 %v238, %v344
  %v361 = vadd.f32 %v239, %v345
  %v362 = vadd.f32 %v240, %v346
  %v363 = vadd.f32 %v241, %v347
  %v364 = vadd.f32 %v242, %v348
  %v365 = vadd.f32 %v243, %v349
  %v366 = vadd.f32 %v244, %v350
  %v367 = vadd.f32 %v245, %v351
  %s368 = scalar_lea.vmem %s2, 2
  %v369 = vld [vmem:[%s368] ss:$4 sm:$0xff]
  %s370 = scalar_lea.vmem %s2, 34
  %v371 = vld [vmem:[%s370] ss:$4 sm:$0xff]
  %372 = vset.pattern.permute.xlu0 2
  %373 = vperm.xlu0 %372, %v34
  %v374 = vpop.permute.xlu0 %373
  %v378 = vlaneseq
  %v379 = vshrl.u32 %v378, 7
  %v380 = vsub.s32 0, %v379
  %v381 = vrot.slane %v369, %v380
  %v382 = vlaneseq
  %v383 = vshrl.u32 %v382, 7
  %v384 = vsub.s32 1, %v383
  %v385 = vrot.slane %v369, %v384
  %v386 = vlaneseq
  %v387 = vshrl.u32 %v386, 7
  %v388 = vsub.s32 2, %v387
  %v389 = vrot.slane %v369, %v388
  %v390 = vlaneseq
  %v391 = vshrl.u32 %v390, 7
  %v392 = vsub.s32 3, %v391
  %v393 = vrot.slane %v369, %v392
  %v394 = vlaneseq
  %v395 = vshrl.u32 %v394, 7
  %v396 = vsub.s32 4, %v395
  %v397 = vrot.slane %v369, %v396
  %v398 = vlaneseq
  %v399 = vshrl.u32 %v398, 7
  %v400 = vsub.s32 5, %v399
  %v401 = vrot.slane %v369, %v400
  %v402 = vlaneseq
  %v403 = vshrl.u32 %v402, 7
  %v404 = vsub.s32 6, %v403
  %v405 = vrot.slane %v369, %v404
  %v406 = vlaneseq
  %v407 = vshrl.u32 %v406, 7
  %v408 = vsub.s32 7, %v407
  %v409 = vrot.slane %v369, %v408
  %v410 = vlaneseq
  %v411 = vshrl.u32 %v410, 7
  %v412 = vsub.s32 0, %v411
  %v413 = vrot.slane %v371, %v412
  %v414 = vlaneseq
  %v415 = vshrl.u32 %v414, 7
  %v416 = vsub.s32 1, %v415
  %v417 = vrot.slane %v371, %v416
  %v418 = vlaneseq
  %v419 = vshrl.u32 %v418, 7
  %v420 = vsub.s32 2, %v419
  %v421 = vrot.slane %v371, %v420
  %v422 = vlaneseq
  %v423 = vshrl.u32 %v422, 7
  %v424 = vsub.s32 3, %v423
  %v425 = vrot.slane %v371, %v424
  %v426 = vlaneseq
  %v427 = vshrl.u32 %v426, 7
  %v428 = vsub.s32 4, %v427
  %v429 = vrot.slane %v371, %v428
  %v430 = vlaneseq
  %v431 = vshrl.u32 %v430, 7
  %v432 = vsub.s32 5, %v431
  %v433 = vrot.slane %v371, %v432
  %v434 = vlaneseq
  %v435 = vshrl.u32 %v434, 7
  %v436 = vsub.s32 6, %v435
  %v437 = vrot.slane %v371, %v436
  %v438 = vlaneseq
  %v439 = vshrl.u32 %v438, 7
  %v440 = vsub.s32 7, %v439
  %v441 = vrot.slane %v371, %v440
  %v458 = vmul.f32 %v374, %v381
  %v459 = vmul.f32 %v374, %v385
  %v460 = vmul.f32 %v374, %v389
  %v461 = vmul.f32 %v374, %v393
  %v462 = vmul.f32 %v374, %v397
  %v463 = vmul.f32 %v374, %v401
  %v464 = vmul.f32 %v374, %v405
  %v465 = vmul.f32 %v374, %v409
  %v466 = vmul.f32 %v374, %v413
  %v467 = vmul.f32 %v374, %v417
  %v468 = vmul.f32 %v374, %v421
  %v469 = vmul.f32 %v374, %v425
  %v470 = vmul.f32 %v374, %v429
  %v471 = vmul.f32 %v374, %v433
  %v472 = vmul.f32 %v374, %v437
  %v473 = vmul.f32 %v374, %v441
  %v474 = vadd.f32 %v352, %v458
  %v475 = vadd.f32 %v353, %v459
  %v476 = vadd.f32 %v354, %v460
  %v477 = vadd.f32 %v355, %v461
  %v478 = vadd.f32 %v356, %v462
  %v479 = vadd.f32 %v357, %v463
  %v480 = vadd.f32 %v358, %v464
  %v481 = vadd.f32 %v359, %v465
  %v482 = vadd.f32 %v360, %v466
  %v483 = vadd.f32 %v361, %v467
  %v484 = vadd.f32 %v362, %v468
  %v485 = vadd.f32 %v363, %v469
  %v486 = vadd.f32 %v364, %v470
  %v487 = vadd.f32 %v365, %v471
  %v488 = vadd.f32 %v366, %v472
  %v489 = vadd.f32 %v367, %v473
  %v490 = vld [vmem:[%s5] sm:$0xff]
  %v491 = vld [vmem:[%s5 + $0x8] sm:$0xff]
  %v492 = vld [vmem:[%s4] ss:$4 sm:$0xff]
  %s493 = scalar_lea.vmem %s4, 32
  %v494 = vld [vmem:[%s493] ss:$4 sm:$0xff]
  %496 = vset.pattern.permute.xlu0 0
  %497 = vperm.xlu0 %496, %v35
  %v498 = vpop.permute.xlu0 %497
  %501 = vset.pattern.permute.xlu0 0
  %502 = vperm.xlu0 %501, %v36
  %v503 = vpop.permute.xlu0 %502
  %506 = vset.pattern.permute.xlu0 0
  %507 = vperm.xlu0 %506, %v37
  %v508 = vpop.permute.xlu0 %507
  %511 = vset.pattern.permute.xlu0 0
  %512 = vperm.xlu0 %511, %v38
  %v513 = vpop.permute.xlu0 %512
  %516 = vset.pattern.permute.xlu0 0
  %517 = vperm.xlu0 %516, %v39
  %v518 = vpop.permute.xlu0 %517
  %v522 = vlaneseq
  %v523 = vshrl.u32 %v522, 7
  %v524 = vsub.s32 0, %v523
  %v525 = vrot.slane %v492, %v524
  %v526 = vlaneseq
  %v527 = vshrl.u32 %v526, 7
  %v528 = vsub.s32 1, %v527
  %v529 = vrot.slane %v492, %v528
  %v530 = vlaneseq
  %v531 = vshrl.u32 %v530, 7
  %v532 = vsub.s32 2, %v531
  %v533 = vrot.slane %v492, %v532
  %v534 = vlaneseq
  %v535 = vshrl.u32 %v534, 7
  %v536 = vsub.s32 3, %v535
  %v537 = vrot.slane %v492, %v536
  %v538 = vlaneseq
  %v539 = vshrl.u32 %v538, 7
  %v540 = vsub.s32 4, %v539
  %v541 = vrot.slane %v492, %v540
  %v542 = vlaneseq
  %v543 = vshrl.u32 %v542, 7
  %v544 = vsub.s32 5, %v543
  %v545 = vrot.slane %v492, %v544
  %v546 = vlaneseq
  %v547 = vshrl.u32 %v546, 7
  %v548 = vsub.s32 6, %v547
  %v549 = vrot.slane %v492, %v548
  %v550 = vlaneseq
  %v551 = vshrl.u32 %v550, 7
  %v552 = vsub.s32 7, %v551
  %v553 = vrot.slane %v492, %v552
  %v554 = vlaneseq
  %v555 = vshrl.u32 %v554, 7
  %v556 = vsub.s32 0, %v555
  %v557 = vrot.slane %v494, %v556
  %v558 = vlaneseq
  %v559 = vshrl.u32 %v558, 7
  %v560 = vsub.s32 1, %v559
  %v561 = vrot.slane %v494, %v560
  %v562 = vlaneseq
  %v563 = vshrl.u32 %v562, 7
  %v564 = vsub.s32 2, %v563
  %v565 = vrot.slane %v494, %v564
  %v566 = vlaneseq
  %v567 = vshrl.u32 %v566, 7
  %v568 = vsub.s32 3, %v567
  %v569 = vrot.slane %v494, %v568
  %v570 = vlaneseq
  %v571 = vshrl.u32 %v570, 7
  %v572 = vsub.s32 4, %v571
  %v573 = vrot.slane %v494, %v572
  %v574 = vlaneseq
  %v575 = vshrl.u32 %v574, 7
  %v576 = vsub.s32 5, %v575
  %v577 = vrot.slane %v494, %v576
  %v578 = vlaneseq
  %v579 = vshrl.u32 %v578, 7
  %v580 = vsub.s32 6, %v579
  %v581 = vrot.slane %v494, %v580
  %v582 = vlaneseq
  %v583 = vshrl.u32 %v582, 7
  %v584 = vsub.s32 7, %v583
  %v585 = vrot.slane %v494, %v584
  %v602 = vmul.f32 %v498, %v525
  %v603 = vmul.f32 %v498, %v529
  %v604 = vmul.f32 %v498, %v533
  %v605 = vmul.f32 %v498, %v537
  %v606 = vmul.f32 %v498, %v541
  %v607 = vmul.f32 %v498, %v545
  %v608 = vmul.f32 %v498, %v549
  %v609 = vmul.f32 %v498, %v553
  %v610 = vmul.f32 %v498, %v557
  %v611 = vmul.f32 %v498, %v561
  %v612 = vmul.f32 %v498, %v565
  %v613 = vmul.f32 %v498, %v569
  %v614 = vmul.f32 %v498, %v573
  %v615 = vmul.f32 %v498, %v577
  %v616 = vmul.f32 %v498, %v581
  %v617 = vmul.f32 %v498, %v585
  %v618 = vmul.f32 %v503, %v525
  %v619 = vmul.f32 %v503, %v529
  %v620 = vmul.f32 %v503, %v533
  %v621 = vmul.f32 %v503, %v537
  %v622 = vmul.f32 %v503, %v541
  %v623 = vmul.f32 %v503, %v545
  %v624 = vmul.f32 %v503, %v549
  %v625 = vmul.f32 %v503, %v553
  %v626 = vmul.f32 %v503, %v557
  %v627 = vmul.f32 %v503, %v561
  %v628 = vmul.f32 %v503, %v565
  %v629 = vmul.f32 %v503, %v569
  %v630 = vmul.f32 %v503, %v573
  %v631 = vmul.f32 %v503, %v577
  %v632 = vmul.f32 %v503, %v581
  %v633 = vmul.f32 %v503, %v585
  %v634 = vmul.f32 %v508, %v525
  %v635 = vmul.f32 %v508, %v529
  %v636 = vmul.f32 %v508, %v533
  %v637 = vmul.f32 %v508, %v537
  %v638 = vmul.f32 %v508, %v541
  %v639 = vmul.f32 %v508, %v545
  %v640 = vmul.f32 %v508, %v549
  %v641 = vmul.f32 %v508, %v553
  %v642 = vmul.f32 %v508, %v557
  %v643 = vmul.f32 %v508, %v561
  %v644 = vmul.f32 %v508, %v565
  %v645 = vmul.f32 %v508, %v569
  %v646 = vmul.f32 %v508, %v573
  %v647 = vmul.f32 %v508, %v577
  %v648 = vmul.f32 %v508, %v581
  %v649 = vmul.f32 %v508, %v585
  %v650 = vmul.f32 %v513, %v525
  %v651 = vmul.f32 %v513, %v529
  %v652 = vmul.f32 %v513, %v533
  %v653 = vmul.f32 %v513, %v537
  %v654 = vmul.f32 %v513, %v541
  %v655 = vmul.f32 %v513, %v545
  %v656 = vmul.f32 %v513, %v549
  %v657 = vmul.f32 %v513, %v553
  %v658 = vmul.f32 %v513, %v557
  %v659 = vmul.f32 %v513, %v561
  %v660 = vmul.f32 %v513, %v565
  %v661 = vmul.f32 %v513, %v569
  %v662 = vmul.f32 %v513, %v573
  %v663 = vmul.f32 %v513, %v577
  %v664 = vmul.f32 %v513, %v581
  %v665 = vmul.f32 %v513, %v585
  %v666 = vmul.f32 %v518, %v525
  %v667 = vmul.f32 %v518, %v529
  %v668 = vmul.f32 %v518, %v533
  %v669 = vmul.f32 %v518, %v537
  %v670 = vmul.f32 %v518, %v541
  %v671 = vmul.f32 %v518, %v545
  %v672 = vmul.f32 %v518, %v549
  %v673 = vmul.f32 %v518, %v553
  %v674 = vmul.f32 %v518, %v557
  %v675 = vmul.f32 %v518, %v561
  %v676 = vmul.f32 %v518, %v565
  %v677 = vmul.f32 %v518, %v569
  %v678 = vmul.f32 %v518, %v573
  %v679 = vmul.f32 %v518, %v577
  %v680 = vmul.f32 %v518, %v581
  %v681 = vmul.f32 %v518, %v585
  %v684 = vlaneseq
  %v685 = vshrl.u32 %v684, 7
  %v686 = vsub.s32 0, %v685
  %v687 = vrot.slane %v490, %v686
  %v688 = vlaneseq
  %v689 = vshrl.u32 %v688, 7
  %v690 = vsub.s32 1, %v689
  %v691 = vrot.slane %v490, %v690
  %v692 = vlaneseq
  %v693 = vshrl.u32 %v692, 7
  %v694 = vsub.s32 2, %v693
  %v695 = vrot.slane %v490, %v694
  %v696 = vlaneseq
  %v697 = vshrl.u32 %v696, 7
  %v698 = vsub.s32 3, %v697
  %v699 = vrot.slane %v490, %v698
  %v700 = vlaneseq
  %v701 = vshrl.u32 %v700, 7
  %v702 = vsub.s32 4, %v701
  %v703 = vrot.slane %v490, %v702
  %v704 = vlaneseq
  %v705 = vshrl.u32 %v704, 7
  %v706 = vsub.s32 5, %v705
  %v707 = vrot.slane %v490, %v706
  %v708 = vlaneseq
  %v709 = vshrl.u32 %v708, 7
  %v710 = vsub.s32 6, %v709
  %v711 = vrot.slane %v490, %v710
  %v712 = vlaneseq
  %v713 = vshrl.u32 %v712, 7
  %v714 = vsub.s32 7, %v713
  %v715 = vrot.slane %v490, %v714
  %v716 = vlaneseq
  %v717 = vshrl.u32 %v716, 7
  %v718 = vsub.s32 0, %v717
  %v719 = vrot.slane %v491, %v718
  %v720 = vlaneseq
  %v721 = vshrl.u32 %v720, 7
  %v722 = vsub.s32 1, %v721
  %v723 = vrot.slane %v491, %v722
  %v724 = vlaneseq
  %v725 = vshrl.u32 %v724, 7
  %v726 = vsub.s32 2, %v725
  %v727 = vrot.slane %v491, %v726
  %v728 = vlaneseq
  %v729 = vshrl.u32 %v728, 7
  %v730 = vsub.s32 3, %v729
  %v731 = vrot.slane %v491, %v730
  %v732 = vlaneseq
  %v733 = vshrl.u32 %v732, 7
  %v734 = vsub.s32 4, %v733
  %v735 = vrot.slane %v491, %v734
  %v736 = vlaneseq
  %v737 = vshrl.u32 %v736, 7
  %v738 = vsub.s32 5, %v737
  %v739 = vrot.slane %v491, %v738
  %v740 = vlaneseq
  %v741 = vshrl.u32 %v740, 7
  %v742 = vsub.s32 6, %v741
  %v743 = vrot.slane %v491, %v742
  %v744 = vlaneseq
  %v745 = vshrl.u32 %v744, 7
  %v746 = vsub.s32 7, %v745
  %v747 = vrot.slane %v491, %v746
  %v764 = vadd.f32 %v687, %v602
  %v765 = vadd.f32 %v691, %v603
  %v766 = vadd.f32 %v695, %v604
  %v767 = vadd.f32 %v699, %v605
  %v768 = vadd.f32 %v703, %v606
  %v769 = vadd.f32 %v707, %v607
  %v770 = vadd.f32 %v711, %v608
  %v771 = vadd.f32 %v715, %v609
  %v772 = vadd.f32 %v719, %v610
  %v773 = vadd.f32 %v723, %v611
  %v774 = vadd.f32 %v727, %v612
  %v775 = vadd.f32 %v731, %v613
  %v776 = vadd.f32 %v735, %v614
  %v777 = vadd.f32 %v739, %v615
  %v778 = vadd.f32 %v743, %v616
  %v779 = vadd.f32 %v747, %v617
  %v780 = vadd.f32 %v687, %v618
  %v781 = vadd.f32 %v691, %v619
  %v782 = vadd.f32 %v695, %v620
  %v783 = vadd.f32 %v699, %v621
  %v784 = vadd.f32 %v703, %v622
  %v785 = vadd.f32 %v707, %v623
  %v786 = vadd.f32 %v711, %v624
  %v787 = vadd.f32 %v715, %v625
  %v788 = vadd.f32 %v719, %v626
  %v789 = vadd.f32 %v723, %v627
  %v790 = vadd.f32 %v727, %v628
  %v791 = vadd.f32 %v731, %v629
  %v792 = vadd.f32 %v735, %v630
  %v793 = vadd.f32 %v739, %v631
  %v794 = vadd.f32 %v743, %v632
  %v795 = vadd.f32 %v747, %v633
  %v796 = vadd.f32 %v687, %v634
  %v797 = vadd.f32 %v691, %v635
  %v798 = vadd.f32 %v695, %v636
  %v799 = vadd.f32 %v699, %v637
  %v800 = vadd.f32 %v703, %v638
  %v801 = vadd.f32 %v707, %v639
  %v802 = vadd.f32 %v711, %v640
  %v803 = vadd.f32 %v715, %v641
  %v804 = vadd.f32 %v719, %v642
  %v805 = vadd.f32 %v723, %v643
  %v806 = vadd.f32 %v727, %v644
  %v807 = vadd.f32 %v731, %v645
  %v808 = vadd.f32 %v735, %v646
  %v809 = vadd.f32 %v739, %v647
  %v810 = vadd.f32 %v743, %v648
  %v811 = vadd.f32 %v747, %v649
  %v812 = vadd.f32 %v687, %v650
  %v813 = vadd.f32 %v691, %v651
  %v814 = vadd.f32 %v695, %v652
  %v815 = vadd.f32 %v699, %v653
  %v816 = vadd.f32 %v703, %v654
  %v817 = vadd.f32 %v707, %v655
  %v818 = vadd.f32 %v711, %v656
  %v819 = vadd.f32 %v715, %v657
  %v820 = vadd.f32 %v719, %v658
  %v821 = vadd.f32 %v723, %v659
  %v822 = vadd.f32 %v727, %v660
  %v823 = vadd.f32 %v731, %v661
  %v824 = vadd.f32 %v735, %v662
  %v825 = vadd.f32 %v739, %v663
  %v826 = vadd.f32 %v743, %v664
  %v827 = vadd.f32 %v747, %v665
  %v828 = vadd.f32 %v687, %v666
  %v829 = vadd.f32 %v691, %v667
  %v830 = vadd.f32 %v695, %v668
  %v831 = vadd.f32 %v699, %v669
  %v832 = vadd.f32 %v703, %v670
  %v833 = vadd.f32 %v707, %v671
  %v834 = vadd.f32 %v711, %v672
  %v835 = vadd.f32 %v715, %v673
  %v836 = vadd.f32 %v719, %v674
  %v837 = vadd.f32 %v723, %v675
  %v838 = vadd.f32 %v727, %v676
  %v839 = vadd.f32 %v731, %v677
  %v840 = vadd.f32 %v735, %v678
  %v841 = vadd.f32 %v739, %v679
  %v842 = vadd.f32 %v743, %v680
  %v843 = vadd.f32 %v747, %v681
  %s844 = scalar_lea.vmem %s4, 1
  %v845 = vld [vmem:[%s844] ss:$4 sm:$0xff]
  %s846 = scalar_lea.vmem %s4, 33
  %v847 = vld [vmem:[%s846] ss:$4 sm:$0xff]
  %848 = vset.pattern.permute.xlu0 1
  %849 = vperm.xlu0 %848, %v35
  %v850 = vpop.permute.xlu0 %849
  %852 = vset.pattern.permute.xlu0 1
  %853 = vperm.xlu0 %852, %v36
  %v854 = vpop.permute.xlu0 %853
  %856 = vset.pattern.permute.xlu0 1
  %857 = vperm.xlu0 %856, %v37
  %v858 = vpop.permute.xlu0 %857
  %860 = vset.pattern.permute.xlu0 1
  %861 = vperm.xlu0 %860, %v38
  %v862 = vpop.permute.xlu0 %861
  %864 = vset.pattern.permute.xlu0 1
  %865 = vperm.xlu0 %864, %v39
  %v866 = vpop.permute.xlu0 %865
  %v870 = vlaneseq
  %v871 = vshrl.u32 %v870, 7
  %v872 = vsub.s32 0, %v871
  %v873 = vrot.slane %v845, %v872
  %v874 = vlaneseq
  %v875 = vshrl.u32 %v874, 7
  %v876 = vsub.s32 1, %v875
  %v877 = vrot.slane %v845, %v876
  %v878 = vlaneseq
  %v879 = vshrl.u32 %v878, 7
  %v880 = vsub.s32 2, %v879
  %v881 = vrot.slane %v845, %v880
  %v882 = vlaneseq
  %v883 = vshrl.u32 %v882, 7
  %v884 = vsub.s32 3, %v883
  %v885 = vrot.slane %v845, %v884
  %v886 = vlaneseq
  %v887 = vshrl.u32 %v886, 7
  %v888 = vsub.s32 4, %v887
  %v889 = vrot.slane %v845, %v888
  %v890 = vlaneseq
  %v891 = vshrl.u32 %v890, 7
  %v892 = vsub.s32 5, %v891
  %v893 = vrot.slane %v845, %v892
  %v894 = vlaneseq
  %v895 = vshrl.u32 %v894, 7
  %v896 = vsub.s32 6, %v895
  %v897 = vrot.slane %v845, %v896
  %v898 = vlaneseq
  %v899 = vshrl.u32 %v898, 7
  %v900 = vsub.s32 7, %v899
  %v901 = vrot.slane %v845, %v900
  %v902 = vlaneseq
  %v903 = vshrl.u32 %v902, 7
  %v904 = vsub.s32 0, %v903
  %v905 = vrot.slane %v847, %v904
  %v906 = vlaneseq
  %v907 = vshrl.u32 %v906, 7
  %v908 = vsub.s32 1, %v907
  %v909 = vrot.slane %v847, %v908
  %v910 = vlaneseq
  %v911 = vshrl.u32 %v910, 7
  %v912 = vsub.s32 2, %v911
  %v913 = vrot.slane %v847, %v912
  %v914 = vlaneseq
  %v915 = vshrl.u32 %v914, 7
  %v916 = vsub.s32 3, %v915
  %v917 = vrot.slane %v847, %v916
  %v918 = vlaneseq
  %v919 = vshrl.u32 %v918, 7
  %v920 = vsub.s32 4, %v919
  %v921 = vrot.slane %v847, %v920
  %v922 = vlaneseq
  %v923 = vshrl.u32 %v922, 7
  %v924 = vsub.s32 5, %v923
  %v925 = vrot.slane %v847, %v924
  %v926 = vlaneseq
  %v927 = vshrl.u32 %v926, 7
  %v928 = vsub.s32 6, %v927
  %v929 = vrot.slane %v847, %v928
  %v930 = vlaneseq
  %v931 = vshrl.u32 %v930, 7
  %v932 = vsub.s32 7, %v931
  %v933 = vrot.slane %v847, %v932
  %v950 = vmul.f32 %v850, %v873
  %v951 = vmul.f32 %v850, %v877
  %v952 = vmul.f32 %v850, %v881
  %v953 = vmul.f32 %v850, %v885
  %v954 = vmul.f32 %v850, %v889
  %v955 = vmul.f32 %v850, %v893
  %v956 = vmul.f32 %v850, %v897
  %v957 = vmul.f32 %v850, %v901
  %v958 = vmul.f32 %v850, %v905
  %v959 = vmul.f32 %v850, %v909
  %v960 = vmul.f32 %v850, %v913
  %v961 = vmul.f32 %v850, %v917
  %v962 = vmul.f32 %v850, %v921
  %v963 = vmul.f32 %v850, %v925
  %v964 = vmul.f32 %v850, %v929
  %v965 = vmul.f32 %v850, %v933
  %v966 = vmul.f32 %v854, %v873
  %v967 = vmul.f32 %v854, %v877
  %v968 = vmul.f32 %v854, %v881
  %v969 = vmul.f32 %v854, %v885
  %v970 = vmul.f32 %v854, %v889
  %v971 = vmul.f32 %v854, %v893
  %v972 = vmul.f32 %v854, %v897
  %v973 = vmul.f32 %v854, %v901
  %v974 = vmul.f32 %v854, %v905
  %v975 = vmul.f32 %v854, %v909
  %v976 = vmul.f32 %v854, %v913
  %v977 = vmul.f32 %v854, %v917
  %v978 = vmul.f32 %v854, %v921
  %v979 = vmul.f32 %v854, %v925
  %v980 = vmul.f32 %v854, %v929
  %v981 = vmul.f32 %v854, %v933
  %v982 = vmul.f32 %v858, %v873
  %v983 = vmul.f32 %v858, %v877
  %v984 = vmul.f32 %v858, %v881
  %v985 = vmul.f32 %v858, %v885
  %v986 = vmul.f32 %v858, %v889
  %v987 = vmul.f32 %v858, %v893
  %v988 = vmul.f32 %v858, %v897
  %v989 = vmul.f32 %v858, %v901
  %v990 = vmul.f32 %v858, %v905
  %v991 = vmul.f32 %v858, %v909
  %v992 = vmul.f32 %v858, %v913
  %v993 = vmul.f32 %v858, %v917
  %v994 = vmul.f32 %v858, %v921
  %v995 = vmul.f32 %v858, %v925
  %v996 = vmul.f32 %v858, %v929
  %v997 = vmul.f32 %v858, %v933
  %v998 = vmul.f32 %v862, %v873
  %v999 = vmul.f32 %v862, %v877
  %v1000 = vmul.f32 %v862, %v881
  %v1001 = vmul.f32 %v862, %v885
  %v1002 = vmul.f32 %v862, %v889
  %v1003 = vmul.f32 %v862, %v893
  %v1004 = vmul.f32 %v862, %v897
  %v1005 = vmul.f32 %v862, %v901
  %v1006 = vmul.f32 %v862, %v905
  %v1007 = vmul.f32 %v862, %v909
  %v1008 = vmul.f32 %v862, %v913
  %v1009 = vmul.f32 %v862, %v917
  %v1010 = vmul.f32 %v862, %v921
  %v1011 = vmul.f32 %v862, %v925
  %v1012 = vmul.f32 %v862, %v929
  %v1013 = vmul.f32 %v862, %v933
  %v1014 = vmul.f32 %v866, %v873
  %v1015 = vmul.f32 %v866, %v877
  %v1016 = vmul.f32 %v866, %v881
  %v1017 = vmul.f32 %v866, %v885
  %v1018 = vmul.f32 %v866, %v889
  %v1019 = vmul.f32 %v866, %v893
  %v1020 = vmul.f32 %v866, %v897
  %v1021 = vmul.f32 %v866, %v901
  %v1022 = vmul.f32 %v866, %v905
  %v1023 = vmul.f32 %v866, %v909
  %v1024 = vmul.f32 %v866, %v913
  %v1025 = vmul.f32 %v866, %v917
  %v1026 = vmul.f32 %v866, %v921
  %v1027 = vmul.f32 %v866, %v925
  %v1028 = vmul.f32 %v866, %v929
  %v1029 = vmul.f32 %v866, %v933
  %v1030 = vadd.f32 %v764, %v950
  %v1031 = vadd.f32 %v765, %v951
  %v1032 = vadd.f32 %v766, %v952
  %v1033 = vadd.f32 %v767, %v953
  %v1034 = vadd.f32 %v768, %v954
  %v1035 = vadd.f32 %v769, %v955
  %v1036 = vadd.f32 %v770, %v956
  %v1037 = vadd.f32 %v771, %v957
  %v1038 = vadd.f32 %v772, %v958
  %v1039 = vadd.f32 %v773, %v959
  %v1040 = vadd.f32 %v774, %v960
  %v1041 = vadd.f32 %v775, %v961
  %v1042 = vadd.f32 %v776, %v962
  %v1043 = vadd.f32 %v777, %v963
  %v1044 = vadd.f32 %v778, %v964
  %v1045 = vadd.f32 %v779, %v965
  %v1046 = vadd.f32 %v780, %v966
  %v1047 = vadd.f32 %v781, %v967
  %v1048 = vadd.f32 %v782, %v968
  %v1049 = vadd.f32 %v783, %v969
  %v1050 = vadd.f32 %v784, %v970
  %v1051 = vadd.f32 %v785, %v971
  %v1052 = vadd.f32 %v786, %v972
  %v1053 = vadd.f32 %v787, %v973
  %v1054 = vadd.f32 %v788, %v974
  %v1055 = vadd.f32 %v789, %v975
  %v1056 = vadd.f32 %v790, %v976
  %v1057 = vadd.f32 %v791, %v977
  %v1058 = vadd.f32 %v792, %v978
  %v1059 = vadd.f32 %v793, %v979
  %v1060 = vadd.f32 %v794, %v980
  %v1061 = vadd.f32 %v795, %v981
  %v1062 = vadd.f32 %v796, %v982
  %v1063 = vadd.f32 %v797, %v983
  %v1064 = vadd.f32 %v798, %v984
  %v1065 = vadd.f32 %v799, %v985
  %v1066 = vadd.f32 %v800, %v986
  %v1067 = vadd.f32 %v801, %v987
  %v1068 = vadd.f32 %v802, %v988
  %v1069 = vadd.f32 %v803, %v989
  %v1070 = vadd.f32 %v804, %v990
  %v1071 = vadd.f32 %v805, %v991
  %v1072 = vadd.f32 %v806, %v992
  %v1073 = vadd.f32 %v807, %v993
  %v1074 = vadd.f32 %v808, %v994
  %v1075 = vadd.f32 %v809, %v995
  %v1076 = vadd.f32 %v810, %v996
  %v1077 = vadd.f32 %v811, %v997
  %v1078 = vadd.f32 %v812, %v998
  %v1079 = vadd.f32 %v813, %v999
  %v1080 = vadd.f32 %v814, %v1000
  %v1081 = vadd.f32 %v815, %v1001
  %v1082 = vadd.f32 %v816, %v1002
  %v1083 = vadd.f32 %v817, %v1003
  %v1084 = vadd.f32 %v818, %v1004
  %v1085 = vadd.f32 %v819, %v1005
  %v1086 = vadd.f32 %v820, %v1006
  %v1087 = vadd.f32 %v821, %v1007
  %v1088 = vadd.f32 %v822, %v1008
  %v1089 = vadd.f32 %v823, %v1009
  %v1090 = vadd.f32 %v824, %v1010
  %v1091 = vadd.f32 %v825, %v1011
  %v1092 = vadd.f32 %v826, %v1012
  %v1093 = vadd.f32 %v827, %v1013
  %v1094 = vadd.f32 %v828, %v1014
  %v1095 = vadd.f32 %v829, %v1015
  %v1096 = vadd.f32 %v830, %v1016
  %v1097 = vadd.f32 %v831, %v1017
  %v1098 = vadd.f32 %v832, %v1018
  %v1099 = vadd.f32 %v833, %v1019
  %v1100 = vadd.f32 %v834, %v1020
  %v1101 = vadd.f32 %v835, %v1021
  %v1102 = vadd.f32 %v836, %v1022
  %v1103 = vadd.f32 %v837, %v1023
  %v1104 = vadd.f32 %v838, %v1024
  %v1105 = vadd.f32 %v839, %v1025
  %v1106 = vadd.f32 %v840, %v1026
  %v1107 = vadd.f32 %v841, %v1027
  %v1108 = vadd.f32 %v842, %v1028
  %v1109 = vadd.f32 %v843, %v1029
  %s1110 = scalar_lea.vmem %s4, 2
  %v1111 = vld [vmem:[%s1110] ss:$4 sm:$0xff]
  %s1112 = scalar_lea.vmem %s4, 34
  %v1113 = vld [vmem:[%s1112] ss:$4 sm:$0xff]
  %1114 = vset.pattern.permute.xlu0 2
  %1115 = vperm.xlu0 %1114, %v35
  %v1116 = vpop.permute.xlu0 %1115
  %1118 = vset.pattern.permute.xlu0 2
  %1119 = vperm.xlu0 %1118, %v36
  %v1120 = vpop.permute.xlu0 %1119
  %1122 = vset.pattern.permute.xlu0 2
  %1123 = vperm.xlu0 %1122, %v37
  %v1124 = vpop.permute.xlu0 %1123
  %1126 = vset.pattern.permute.xlu0 2
  %1127 = vperm.xlu0 %1126, %v38
  %v1128 = vpop.permute.xlu0 %1127
  %1130 = vset.pattern.permute.xlu0 2
  %1131 = vperm.xlu0 %1130, %v39
  %v1132 = vpop.permute.xlu0 %1131
  %v1136 = vlaneseq
  %v1137 = vshrl.u32 %v1136, 7
  %v1138 = vsub.s32 0, %v1137
  %v1139 = vrot.slane %v1111, %v1138
  %v1140 = vlaneseq
  %v1141 = vshrl.u32 %v1140, 7
  %v1142 = vsub.s32 1, %v1141
  %v1143 = vrot.slane %v1111, %v1142
  %v1144 = vlaneseq
  %v1145 = vshrl.u32 %v1144, 7
  %v1146 = vsub.s32 2, %v1145
  %v1147 = vrot.slane %v1111, %v1146
  %v1148 = vlaneseq
  %v1149 = vshrl.u32 %v1148, 7
  %v1150 = vsub.s32 3, %v1149
  %v1151 = vrot.slane %v1111, %v1150
  %v1152 = vlaneseq
  %v1153 = vshrl.u32 %v1152, 7
  %v1154 = vsub.s32 4, %v1153
  %v1155 = vrot.slane %v1111, %v1154
  %v1156 = vlaneseq
  %v1157 = vshrl.u32 %v1156, 7
  %v1158 = vsub.s32 5, %v1157
  %v1159 = vrot.slane %v1111, %v1158
  %v1160 = vlaneseq
  %v1161 = vshrl.u32 %v1160, 7
  %v1162 = vsub.s32 6, %v1161
  %v1163 = vrot.slane %v1111, %v1162
  %v1164 = vlaneseq
  %v1165 = vshrl.u32 %v1164, 7
  %v1166 = vsub.s32 7, %v1165
  %v1167 = vrot.slane %v1111, %v1166
  %v1168 = vlaneseq
  %v1169 = vshrl.u32 %v1168, 7
  %v1170 = vsub.s32 0, %v1169
  %v1171 = vrot.slane %v1113, %v1170
  %v1172 = vlaneseq
  %v1173 = vshrl.u32 %v1172, 7
  %v1174 = vsub.s32 1, %v1173
  %v1175 = vrot.slane %v1113, %v1174
  %v1176 = vlaneseq
  %v1177 = vshrl.u32 %v1176, 7
  %v1178 = vsub.s32 2, %v1177
  %v1179 = vrot.slane %v1113, %v1178
  %v1180 = vlaneseq
  %v1181 = vshrl.u32 %v1180, 7
  %v1182 = vsub.s32 3, %v1181
  %v1183 = vrot.slane %v1113, %v1182
  %v1184 = vlaneseq
  %v1185 = vshrl.u32 %v1184, 7
  %v1186 = vsub.s32 4, %v1185
  %v1187 = vrot.slane %v1113, %v1186
  %v1188 = vlaneseq
  %v1189 = vshrl.u32 %v1188, 7
  %v1190 = vsub.s32 5, %v1189
  %v1191 = vrot.slane %v1113, %v1190
  %v1192 = vlaneseq
  %v1193 = vshrl.u32 %v1192, 7
  %v1194 = vsub.s32 6, %v1193
  %v1195 = vrot.slane %v1113, %v1194
  %v1196 = vlaneseq
  %v1197 = vshrl.u32 %v1196, 7
  %v1198 = vsub.s32 7, %v1197
  %v1199 = vrot.slane %v1113, %v1198
  %v1216 = vmul.f32 %v1116, %v1139
  %v1217 = vmul.f32 %v1116, %v1143
  %v1218 = vmul.f32 %v1116, %v1147
  %v1219 = vmul.f32 %v1116, %v1151
  %v1220 = vmul.f32 %v1116, %v1155
  %v1221 = vmul.f32 %v1116, %v1159
  %v1222 = vmul.f32 %v1116, %v1163
  %v1223 = vmul.f32 %v1116, %v1167
  %v1224 = vmul.f32 %v1116, %v1171
  %v1225 = vmul.f32 %v1116, %v1175
  %v1226 = vmul.f32 %v1116, %v1179
  %v1227 = vmul.f32 %v1116, %v1183
  %v1228 = vmul.f32 %v1116, %v1187
  %v1229 = vmul.f32 %v1116, %v1191
  %v1230 = vmul.f32 %v1116, %v1195
  %v1231 = vmul.f32 %v1116, %v1199
  %v1232 = vmul.f32 %v1120, %v1139
  %v1233 = vmul.f32 %v1120, %v1143
  %v1234 = vmul.f32 %v1120, %v1147
  %v1235 = vmul.f32 %v1120, %v1151
  %v1236 = vmul.f32 %v1120, %v1155
  %v1237 = vmul.f32 %v1120, %v1159
  %v1238 = vmul.f32 %v1120, %v1163
  %v1239 = vmul.f32 %v1120, %v1167
  %v1240 = vmul.f32 %v1120, %v1171
  %v1241 = vmul.f32 %v1120, %v1175
  %v1242 = vmul.f32 %v1120, %v1179
  %v1243 = vmul.f32 %v1120, %v1183
  %v1244 = vmul.f32 %v1120, %v1187
  %v1245 = vmul.f32 %v1120, %v1191
  %v1246 = vmul.f32 %v1120, %v1195
  %v1247 = vmul.f32 %v1120, %v1199
  %v1248 = vmul.f32 %v1124, %v1139
  %v1249 = vmul.f32 %v1124, %v1143
  %v1250 = vmul.f32 %v1124, %v1147
  %v1251 = vmul.f32 %v1124, %v1151
  %v1252 = vmul.f32 %v1124, %v1155
  %v1253 = vmul.f32 %v1124, %v1159
  %v1254 = vmul.f32 %v1124, %v1163
  %v1255 = vmul.f32 %v1124, %v1167
  %v1256 = vmul.f32 %v1124, %v1171
  %v1257 = vmul.f32 %v1124, %v1175
  %v1258 = vmul.f32 %v1124, %v1179
  %v1259 = vmul.f32 %v1124, %v1183
  %v1260 = vmul.f32 %v1124, %v1187
  %v1261 = vmul.f32 %v1124, %v1191
  %v1262 = vmul.f32 %v1124, %v1195
  %v1263 = vmul.f32 %v1124, %v1199
  %v1264 = vmul.f32 %v1128, %v1139
  %v1265 = vmul.f32 %v1128, %v1143
  %v1266 = vmul.f32 %v1128, %v1147
  %v1267 = vmul.f32 %v1128, %v1151
  %v1268 = vmul.f32 %v1128, %v1155
  %v1269 = vmul.f32 %v1128, %v1159
  %v1270 = vmul.f32 %v1128, %v1163
  %v1271 = vmul.f32 %v1128, %v1167
  %v1272 = vmul.f32 %v1128, %v1171
  %v1273 = vmul.f32 %v1128, %v1175
  %v1274 = vmul.f32 %v1128, %v1179
  %v1275 = vmul.f32 %v1128, %v1183
  %v1276 = vmul.f32 %v1128, %v1187
  %v1277 = vmul.f32 %v1128, %v1191
  %v1278 = vmul.f32 %v1128, %v1195
  %v1279 = vmul.f32 %v1128, %v1199
  %v1280 = vmul.f32 %v1132, %v1139
  %v1281 = vmul.f32 %v1132, %v1143
  %v1282 = vmul.f32 %v1132, %v1147
  %v1283 = vmul.f32 %v1132, %v1151
  %v1284 = vmul.f32 %v1132, %v1155
  %v1285 = vmul.f32 %v1132, %v1159
  %v1286 = vmul.f32 %v1132, %v1163
  %v1287 = vmul.f32 %v1132, %v1167
  %v1288 = vmul.f32 %v1132, %v1171
  %v1289 = vmul.f32 %v1132, %v1175
  %v1290 = vmul.f32 %v1132, %v1179
  %v1291 = vmul.f32 %v1132, %v1183
  %v1292 = vmul.f32 %v1132, %v1187
  %v1293 = vmul.f32 %v1132, %v1191
  %v1294 = vmul.f32 %v1132, %v1195
  %v1295 = vmul.f32 %v1132, %v1199
  %v1296 = vadd.f32 %v1030, %v1216
  %v1297 = vadd.f32 %v1031, %v1217
  %v1298 = vadd.f32 %v1032, %v1218
  %v1299 = vadd.f32 %v1033, %v1219
  %v1300 = vadd.f32 %v1034, %v1220
  %v1301 = vadd.f32 %v1035, %v1221
  %v1302 = vadd.f32 %v1036, %v1222
  %v1303 = vadd.f32 %v1037, %v1223
  %v1304 = vadd.f32 %v1038, %v1224
  %v1305 = vadd.f32 %v1039, %v1225
  %v1306 = vadd.f32 %v1040, %v1226
  %v1307 = vadd.f32 %v1041, %v1227
  %v1308 = vadd.f32 %v1042, %v1228
  %v1309 = vadd.f32 %v1043, %v1229
  %v1310 = vadd.f32 %v1044, %v1230
  %v1311 = vadd.f32 %v1045, %v1231
  %v1312 = vadd.f32 %v1046, %v1232
  %v1313 = vadd.f32 %v1047, %v1233
  %v1314 = vadd.f32 %v1048, %v1234
  %v1315 = vadd.f32 %v1049, %v1235
  %v1316 = vadd.f32 %v1050, %v1236
  %v1317 = vadd.f32 %v1051, %v1237
  %v1318 = vadd.f32 %v1052, %v1238
  %v1319 = vadd.f32 %v1053, %v1239
  %v1320 = vadd.f32 %v1054, %v1240
  %v1321 = vadd.f32 %v1055, %v1241
  %v1322 = vadd.f32 %v1056, %v1242
  %v1323 = vadd.f32 %v1057, %v1243
  %v1324 = vadd.f32 %v1058, %v1244
  %v1325 = vadd.f32 %v1059, %v1245
  %v1326 = vadd.f32 %v1060, %v1246
  %v1327 = vadd.f32 %v1061, %v1247
  %v1328 = vadd.f32 %v1062, %v1248
  %v1329 = vadd.f32 %v1063, %v1249
  %v1330 = vadd.f32 %v1064, %v1250
  %v1331 = vadd.f32 %v1065, %v1251
  %v1332 = vadd.f32 %v1066, %v1252
  %v1333 = vadd.f32 %v1067, %v1253
  %v1334 = vadd.f32 %v1068, %v1254
  %v1335 = vadd.f32 %v1069, %v1255
  %v1336 = vadd.f32 %v1070, %v1256
  %v1337 = vadd.f32 %v1071, %v1257
  %v1338 = vadd.f32 %v1072, %v1258
  %v1339 = vadd.f32 %v1073, %v1259
  %v1340 = vadd.f32 %v1074, %v1260
  %v1341 = vadd.f32 %v1075, %v1261
  %v1342 = vadd.f32 %v1076, %v1262
  %v1343 = vadd.f32 %v1077, %v1263
  %v1344 = vadd.f32 %v1078, %v1264
  %v1345 = vadd.f32 %v1079, %v1265
  %v1346 = vadd.f32 %v1080, %v1266
  %v1347 = vadd.f32 %v1081, %v1267
  %v1348 = vadd.f32 %v1082, %v1268
  %v1349 = vadd.f32 %v1083, %v1269
  %v1350 = vadd.f32 %v1084, %v1270
  %v1351 = vadd.f32 %v1085, %v1271
  %v1352 = vadd.f32 %v1086, %v1272
  %v1353 = vadd.f32 %v1087, %v1273
  %v1354 = vadd.f32 %v1088, %v1274
  %v1355 = vadd.f32 %v1089, %v1275
  %v1356 = vadd.f32 %v1090, %v1276
  %v1357 = vadd.f32 %v1091, %v1277
  %v1358 = vadd.f32 %v1092, %v1278
  %v1359 = vadd.f32 %v1093, %v1279
  %v1360 = vadd.f32 %v1094, %v1280
  %v1361 = vadd.f32 %v1095, %v1281
  %v1362 = vadd.f32 %v1096, %v1282
  %v1363 = vadd.f32 %v1097, %v1283
  %v1364 = vadd.f32 %v1098, %v1284
  %v1365 = vadd.f32 %v1099, %v1285
  %v1366 = vadd.f32 %v1100, %v1286
  %v1367 = vadd.f32 %v1101, %v1287
  %v1368 = vadd.f32 %v1102, %v1288
  %v1369 = vadd.f32 %v1103, %v1289
  %v1370 = vadd.f32 %v1104, %v1290
  %v1371 = vadd.f32 %v1105, %v1291
  %v1372 = vadd.f32 %v1106, %v1292
  %v1373 = vadd.f32 %v1107, %v1293
  %v1374 = vadd.f32 %v1108, %v1294
  %v1375 = vadd.f32 %v1109, %v1295
  %v1376 = vld [vmem:[%s6] sm:$0xff]
  %v1377 = vld [vmem:[%s6 + $0x8] sm:$0xff]
  %v1380 = vlaneseq
  %v1381 = vshrl.u32 %v1380, 7
  %v1382 = vsub.s32 0, %v1381
  %v1383 = vrot.slane %v1376, %v1382
  %v1384 = vlaneseq
  %v1385 = vshrl.u32 %v1384, 7
  %v1386 = vsub.s32 1, %v1385
  %v1387 = vrot.slane %v1376, %v1386
  %v1388 = vlaneseq
  %v1389 = vshrl.u32 %v1388, 7
  %v1390 = vsub.s32 2, %v1389
  %v1391 = vrot.slane %v1376, %v1390
  %v1392 = vlaneseq
  %v1393 = vshrl.u32 %v1392, 7
  %v1394 = vsub.s32 3, %v1393
  %v1395 = vrot.slane %v1376, %v1394
  %v1396 = vlaneseq
  %v1397 = vshrl.u32 %v1396, 7
  %v1398 = vsub.s32 4, %v1397
  %v1399 = vrot.slane %v1376, %v1398
  %v1400 = vlaneseq
  %v1401 = vshrl.u32 %v1400, 7
  %v1402 = vsub.s32 5, %v1401
  %v1403 = vrot.slane %v1376, %v1402
  %v1404 = vlaneseq
  %v1405 = vshrl.u32 %v1404, 7
  %v1406 = vsub.s32 6, %v1405
  %v1407 = vrot.slane %v1376, %v1406
  %v1408 = vlaneseq
  %v1409 = vshrl.u32 %v1408, 7
  %v1410 = vsub.s32 7, %v1409
  %v1411 = vrot.slane %v1376, %v1410
  %v1412 = vlaneseq
  %v1413 = vshrl.u32 %v1412, 7
  %v1414 = vsub.s32 0, %v1413
  %v1415 = vrot.slane %v1377, %v1414
  %v1416 = vlaneseq
  %v1417 = vshrl.u32 %v1416, 7
  %v1418 = vsub.s32 1, %v1417
  %v1419 = vrot.slane %v1377, %v1418
  %v1420 = vlaneseq
  %v1421 = vshrl.u32 %v1420, 7
  %v1422 = vsub.s32 2, %v1421
  %v1423 = vrot.slane %v1377, %v1422
  %v1424 = vlaneseq
  %v1425 = vshrl.u32 %v1424, 7
  %v1426 = vsub.s32 3, %v1425
  %v1427 = vrot.slane %v1377, %v1426
  %v1428 = vlaneseq
  %v1429 = vshrl.u32 %v1428, 7
  %v1430 = vsub.s32 4, %v1429
  %v1431 = vrot.slane %v1377, %v1430
  %v1432 = vlaneseq
  %v1433 = vshrl.u32 %v1432, 7
  %v1434 = vsub.s32 5, %v1433
  %v1435 = vrot.slane %v1377, %v1434
  %v1436 = vlaneseq
  %v1437 = vshrl.u32 %v1436, 7
  %v1438 = vsub.s32 6, %v1437
  %v1439 = vrot.slane %v1377, %v1438
  %v1440 = vlaneseq
  %v1441 = vshrl.u32 %v1440, 7
  %v1442 = vsub.s32 7, %v1441
  %v1443 = vrot.slane %v1377, %v1442
  %v1460 = vmul.f32 %v474, %v1383
  %v1461 = vmul.f32 %v475, %v1387
  %v1462 = vmul.f32 %v476, %v1391
  %v1463 = vmul.f32 %v477, %v1395
  %v1464 = vmul.f32 %v478, %v1399
  %v1465 = vmul.f32 %v479, %v1403
  %v1466 = vmul.f32 %v480, %v1407
  %v1467 = vmul.f32 %v481, %v1411
  %v1468 = vmul.f32 %v482, %v1415
  %v1469 = vmul.f32 %v483, %v1419
  %v1470 = vmul.f32 %v484, %v1423
  %v1471 = vmul.f32 %v485, %v1427
  %v1472 = vmul.f32 %v486, %v1431
  %v1473 = vmul.f32 %v487, %v1435
  %v1474 = vmul.f32 %v488, %v1439
  %v1475 = vmul.f32 %v489, %v1443
  %v1476 = vld [vmem:[%s7] sm:$0xff]
  %v1477 = vld [vmem:[%s7 + $0x8] sm:$0xff]
  %v1478 = vld [vmem:[%s7 + $0x10] sm:$0xff]
  %v1479 = vld [vmem:[%s7 + $0x18] sm:$0xff]
  %v1480 = vld [vmem:[%s7 + $0x20] sm:$0xff]
  %v1481 = vld [vmem:[%s7 + $0x28] sm:$0xff]
  %v1482 = vld [vmem:[%s7 + $0x30] sm:$0xff]
  %v1483 = vld [vmem:[%s7 + $0x38] sm:$0xff]
  %v1484 = vld [vmem:[%s7 + $0x40] sm:$0xff]
  %v1485 = vld [vmem:[%s7 + $0x48] sm:$0xff]
  %v1496 = vlaneseq
  %v1497 = vshrl.u32 %v1496, 7
  %v1498 = vsub.s32 0, %v1497
  %v1499 = vrot.slane %v1476, %v1498
  %v1500 = vlaneseq
  %v1501 = vshrl.u32 %v1500, 7
  %v1502 = vsub.s32 1, %v1501
  %v1503 = vrot.slane %v1476, %v1502
  %v1504 = vlaneseq
  %v1505 = vshrl.u32 %v1504, 7
  %v1506 = vsub.s32 2, %v1505
  %v1507 = vrot.slane %v1476, %v1506
  %v1508 = vlaneseq
  %v1509 = vshrl.u32 %v1508, 7
  %v1510 = vsub.s32 3, %v1509
  %v1511 = vrot.slane %v1476, %v1510
  %v1512 = vlaneseq
  %v1513 = vshrl.u32 %v1512, 7
  %v1514 = vsub.s32 4, %v1513
  %v1515 = vrot.slane %v1476, %v1514
  %v1516 = vlaneseq
  %v1517 = vshrl.u32 %v1516, 7
  %v1518 = vsub.s32 5, %v1517
  %v1519 = vrot.slane %v1476, %v1518
  %v1520 = vlaneseq
  %v1521 = vshrl.u32 %v1520, 7
  %v1522 = vsub.s32 6, %v1521
  %v1523 = vrot.slane %v1476, %v1522
  %v1524 = vlaneseq
  %v1525 = vshrl.u32 %v1524, 7
  %v1526 = vsub.s32 7, %v1525
  %v1527 = vrot.slane %v1476, %v1526
  %v1528 = vlaneseq
  %v1529 = vshrl.u32 %v1528, 7
  %v1530 = vsub.s32 0, %v1529
  %v1531 = vrot.slane %v1477, %v1530
  %v1532 = vlaneseq
  %v1533 = vshrl.u32 %v1532, 7
  %v1534 = vsub.s32 1, %v1533
  %v1535 = vrot.slane %v1477, %v1534
  %v1536 = vlaneseq
  %v1537 = vshrl.u32 %v1536, 7
  %v1538 = vsub.s32 2, %v1537
  %v1539 = vrot.slane %v1477, %v1538
  %v1540 = vlaneseq
  %v1541 = vshrl.u32 %v1540, 7
  %v1542 = vsub.s32 3, %v1541
  %v1543 = vrot.slane %v1477, %v1542
  %v1544 = vlaneseq
  %v1545 = vshrl.u32 %v1544, 7
  %v1546 = vsub.s32 4, %v1545
  %v1547 = vrot.slane %v1477, %v1546
  %v1548 = vlaneseq
  %v1549 = vshrl.u32 %v1548, 7
  %v1550 = vsub.s32 5, %v1549
  %v1551 = vrot.slane %v1477, %v1550
  %v1552 = vlaneseq
  %v1553 = vshrl.u32 %v1552, 7
  %v1554 = vsub.s32 6, %v1553
  %v1555 = vrot.slane %v1477, %v1554
  %v1556 = vlaneseq
  %v1557 = vshrl.u32 %v1556, 7
  %v1558 = vsub.s32 7, %v1557
  %v1559 = vrot.slane %v1477, %v1558
  %v1560 = vlaneseq
  %v1561 = vshrl.u32 %v1560, 7
  %v1562 = vsub.s32 0, %v1561
  %v1563 = vrot.slane %v1478, %v1562
  %v1564 = vlaneseq
  %v1565 = vshrl.u32 %v1564, 7
  %v1566 = vsub.s32 1, %v1565
  %v1567 = vrot.slane %v1478, %v1566
  %v1568 = vlaneseq
  %v1569 = vshrl.u32 %v1568, 7
  %v1570 = vsub.s32 2, %v1569
  %v1571 = vrot.slane %v1478, %v1570
  %v1572 = vlaneseq
  %v1573 = vshrl.u32 %v1572, 7
  %v1574 = vsub.s32 3, %v1573
  %v1575 = vrot.slane %v1478, %v1574
  %v1576 = vlaneseq
  %v1577 = vshrl.u32 %v1576, 7
  %v1578 = vsub.s32 4, %v1577
  %v1579 = vrot.slane %v1478, %v1578
  %v1580 = vlaneseq
  %v1581 = vshrl.u32 %v1580, 7
  %v1582 = vsub.s32 5, %v1581
  %v1583 = vrot.slane %v1478, %v1582
  %v1584 = vlaneseq
  %v1585 = vshrl.u32 %v1584, 7
  %v1586 = vsub.s32 6, %v1585
  %v1587 = vrot.slane %v1478, %v1586
  %v1588 = vlaneseq
  %v1589 = vshrl.u32 %v1588, 7
  %v1590 = vsub.s32 7, %v1589
  %v1591 = vrot.slane %v1478, %v1590
  %v1592 = vlaneseq
  %v1593 = vshrl.u32 %v1592, 7
  %v1594 = vsub.s32 0, %v1593
  %v1595 = vrot.slane %v1479, %v1594
  %v1596 = vlaneseq
  %v1597 = vshrl.u32 %v1596, 7
  %v1598 = vsub.s32 1, %v1597
  %v1599 = vrot.slane %v1479, %v1598
  %v1600 = vlaneseq
  %v1601 = vshrl.u32 %v1600, 7
  %v1602 = vsub.s32 2, %v1601
  %v1603 = vrot.slane %v1479, %v1602
  %v1604 = vlaneseq
  %v1605 = vshrl.u32 %v1604, 7
  %v1606 = vsub.s32 3, %v1605
  %v1607 = vrot.slane %v1479, %v1606
  %v1608 = vlaneseq
  %v1609 = vshrl.u32 %v1608, 7
  %v1610 = vsub.s32 4, %v1609
  %v1611 = vrot.slane %v1479, %v1610
  %v1612 = vlaneseq
  %v1613 = vshrl.u32 %v1612, 7
  %v1614 = vsub.s32 5, %v1613
  %v1615 = vrot.slane %v1479, %v1614
  %v1616 = vlaneseq
  %v1617 = vshrl.u32 %v1616, 7
  %v1618 = vsub.s32 6, %v1617
  %v1619 = vrot.slane %v1479, %v1618
  %v1620 = vlaneseq
  %v1621 = vshrl.u32 %v1620, 7
  %v1622 = vsub.s32 7, %v1621
  %v1623 = vrot.slane %v1479, %v1622
  %v1624 = vlaneseq
  %v1625 = vshrl.u32 %v1624, 7
  %v1626 = vsub.s32 0, %v1625
  %v1627 = vrot.slane %v1480, %v1626
  %v1628 = vlaneseq
  %v1629 = vshrl.u32 %v1628, 7
  %v1630 = vsub.s32 1, %v1629
  %v1631 = vrot.slane %v1480, %v1630
  %v1632 = vlaneseq
  %v1633 = vshrl.u32 %v1632, 7
  %v1634 = vsub.s32 2, %v1633
  %v1635 = vrot.slane %v1480, %v1634
  %v1636 = vlaneseq
  %v1637 = vshrl.u32 %v1636, 7
  %v1638 = vsub.s32 3, %v1637
  %v1639 = vrot.slane %v1480, %v1638
  %v1640 = vlaneseq
  %v1641 = vshrl.u32 %v1640, 7
  %v1642 = vsub.s32 4, %v1641
  %v1643 = vrot.slane %v1480, %v1642
  %v1644 = vlaneseq
  %v1645 = vshrl.u32 %v1644, 7
  %v1646 = vsub.s32 5, %v1645
  %v1647 = vrot.slane %v1480, %v1646
  %v1648 = vlaneseq
  %v1649 = vshrl.u32 %v1648, 7
  %v1650 = vsub.s32 6, %v1649
  %v1651 = vrot.slane %v1480, %v1650
  %v1652 = vlaneseq
  %v1653 = vshrl.u32 %v1652, 7
  %v1654 = vsub.s32 7, %v1653
  %v1655 = vrot.slane %v1480, %v1654
  %v1656 = vlaneseq
  %v1657 = vshrl.u32 %v1656, 7
  %v1658 = vsub.s32 0, %v1657
  %v1659 = vrot.slane %v1481, %v1658
  %v1660 = vlaneseq
  %v1661 = vshrl.u32 %v1660, 7
  %v1662 = vsub.s32 1, %v1661
  %v1663 = vrot.slane %v1481, %v1662
  %v1664 = vlaneseq
  %v1665 = vshrl.u32 %v1664, 7
  %v1666 = vsub.s32 2, %v1665
  %v1667 = vrot.slane %v1481, %v1666
  %v1668 = vlaneseq
  %v1669 = vshrl.u32 %v1668, 7
  %v1670 = vsub.s32 3, %v1669
  %v1671 = vrot.slane %v1481, %v1670
  %v1672 = vlaneseq
  %v1673 = vshrl.u32 %v1672, 7
  %v1674 = vsub.s32 4, %v1673
  %v1675 = vrot.slane %v1481, %v1674
  %v1676 = vlaneseq
  %v1677 = vshrl.u32 %v1676, 7
  %v1678 = vsub.s32 5, %v1677
  %v1679 = vrot.slane %v1481, %v1678
  %v1680 = vlaneseq
  %v1681 = vshrl.u32 %v1680, 7
  %v1682 = vsub.s32 6, %v1681
  %v1683 = vrot.slane %v1481, %v1682
  %v1684 = vlaneseq
  %v1685 = vshrl.u32 %v1684, 7
  %v1686 = vsub.s32 7, %v1685
  %v1687 = vrot.slane %v1481, %v1686
  %v1688 = vlaneseq
  %v1689 = vshrl.u32 %v1688, 7
  %v1690 = vsub.s32 0, %v1689
  %v1691 = vrot.slane %v1482, %v1690
  %v1692 = vlaneseq
  %v1693 = vshrl.u32 %v1692, 7
  %v1694 = vsub.s32 1, %v1693
  %v1695 = vrot.slane %v1482, %v1694
  %v1696 = vlaneseq
  %v1697 = vshrl.u32 %v1696, 7
  %v1698 = vsub.s32 2, %v1697
  %v1699 = vrot.slane %v1482, %v1698
  %v1700 = vlaneseq
  %v1701 = vshrl.u32 %v1700, 7
  %v1702 = vsub.s32 3, %v1701
  %v1703 = vrot.slane %v1482, %v1702
  %v1704 = vlaneseq
  %v1705 = vshrl.u32 %v1704, 7
  %v1706 = vsub.s32 4, %v1705
  %v1707 = vrot.slane %v1482, %v1706
  %v1708 = vlaneseq
  %v1709 = vshrl.u32 %v1708, 7
  %v1710 = vsub.s32 5, %v1709
  %v1711 = vrot.slane %v1482, %v1710
  %v1712 = vlaneseq
  %v1713 = vshrl.u32 %v1712, 7
  %v1714 = vsub.s32 6, %v1713
  %v1715 = vrot.slane %v1482, %v1714
  %v1716 = vlaneseq
  %v1717 = vshrl.u32 %v1716, 7
  %v1718 = vsub.s32 7, %v1717
  %v1719 = vrot.slane %v1482, %v1718
  %v1720 = vlaneseq
  %v1721 = vshrl.u32 %v1720, 7
  %v1722 = vsub.s32 0, %v1721
  %v1723 = vrot.slane %v1483, %v1722
  %v1724 = vlaneseq
  %v1725 = vshrl.u32 %v1724, 7
  %v1726 = vsub.s32 1, %v1725
  %v1727 = vrot.slane %v1483, %v1726
  %v1728 = vlaneseq
  %v1729 = vshrl.u32 %v1728, 7
  %v1730 = vsub.s32 2, %v1729
  %v1731 = vrot.slane %v1483, %v1730
  %v1732 = vlaneseq
  %v1733 = vshrl.u32 %v1732, 7
  %v1734 = vsub.s32 3, %v1733
  %v1735 = vrot.slane %v1483, %v1734
  %v1736 = vlaneseq
  %v1737 = vshrl.u32 %v1736, 7
  %v1738 = vsub.s32 4, %v1737
  %v1739 = vrot.slane %v1483, %v1738
  %v1740 = vlaneseq
  %v1741 = vshrl.u32 %v1740, 7
  %v1742 = vsub.s32 5, %v1741
  %v1743 = vrot.slane %v1483, %v1742
  %v1744 = vlaneseq
  %v1745 = vshrl.u32 %v1744, 7
  %v1746 = vsub.s32 6, %v1745
  %v1747 = vrot.slane %v1483, %v1746
  %v1748 = vlaneseq
  %v1749 = vshrl.u32 %v1748, 7
  %v1750 = vsub.s32 7, %v1749
  %v1751 = vrot.slane %v1483, %v1750
  %v1752 = vlaneseq
  %v1753 = vshrl.u32 %v1752, 7
  %v1754 = vsub.s32 0, %v1753
  %v1755 = vrot.slane %v1484, %v1754
  %v1756 = vlaneseq
  %v1757 = vshrl.u32 %v1756, 7
  %v1758 = vsub.s32 1, %v1757
  %v1759 = vrot.slane %v1484, %v1758
  %v1760 = vlaneseq
  %v1761 = vshrl.u32 %v1760, 7
  %v1762 = vsub.s32 2, %v1761
  %v1763 = vrot.slane %v1484, %v1762
  %v1764 = vlaneseq
  %v1765 = vshrl.u32 %v1764, 7
  %v1766 = vsub.s32 3, %v1765
  %v1767 = vrot.slane %v1484, %v1766
  %v1768 = vlaneseq
  %v1769 = vshrl.u32 %v1768, 7
  %v1770 = vsub.s32 4, %v1769
  %v1771 = vrot.slane %v1484, %v1770
  %v1772 = vlaneseq
  %v1773 = vshrl.u32 %v1772, 7
  %v1774 = vsub.s32 5, %v1773
  %v1775 = vrot.slane %v1484, %v1774
  %v1776 = vlaneseq
  %v1777 = vshrl.u32 %v1776, 7
  %v1778 = vsub.s32 6, %v1777
  %v1779 = vrot.slane %v1484, %v1778
  %v1780 = vlaneseq
  %v1781 = vshrl.u32 %v1780, 7
  %v1782 = vsub.s32 7, %v1781
  %v1783 = vrot.slane %v1484, %v1782
  %v1784 = vlaneseq
  %v1785 = vshrl.u32 %v1784, 7
  %v1786 = vsub.s32 0, %v1785
  %v1787 = vrot.slane %v1485, %v1786
  %v1788 = vlaneseq
  %v1789 = vshrl.u32 %v1788, 7
  %v1790 = vsub.s32 1, %v1789
  %v1791 = vrot.slane %v1485, %v1790
  %v1792 = vlaneseq
  %v1793 = vshrl.u32 %v1792, 7
  %v1794 = vsub.s32 2, %v1793
  %v1795 = vrot.slane %v1485, %v1794
  %v1796 = vlaneseq
  %v1797 = vshrl.u32 %v1796, 7
  %v1798 = vsub.s32 3, %v1797
  %v1799 = vrot.slane %v1485, %v1798
  %v1800 = vlaneseq
  %v1801 = vshrl.u32 %v1800, 7
  %v1802 = vsub.s32 4, %v1801
  %v1803 = vrot.slane %v1485, %v1802
  %v1804 = vlaneseq
  %v1805 = vshrl.u32 %v1804, 7
  %v1806 = vsub.s32 5, %v1805
  %v1807 = vrot.slane %v1485, %v1806
  %v1808 = vlaneseq
  %v1809 = vshrl.u32 %v1808, 7
  %v1810 = vsub.s32 6, %v1809
  %v1811 = vrot.slane %v1485, %v1810
  %v1812 = vlaneseq
  %v1813 = vshrl.u32 %v1812, 7
  %v1814 = vsub.s32 7, %v1813
  %v1815 = vrot.slane %v1485, %v1814
  %v1896 = vmul.f32 %v1296, %v1499
  %v1897 = vmul.f32 %v1297, %v1503
  %v1898 = vmul.f32 %v1298, %v1507
  %v1899 = vmul.f32 %v1299, %v1511
  %v1900 = vmul.f32 %v1300, %v1515
  %v1901 = vmul.f32 %v1301, %v1519
  %v1902 = vmul.f32 %v1302, %v1523
  %v1903 = vmul.f32 %v1303, %v1527
  %v1904 = vmul.f32 %v1304, %v1531
  %v1905 = vmul.f32 %v1305, %v1535
  %v1906 = vmul.f32 %v1306, %v1539
  %v1907 = vmul.f32 %v1307, %v1543
  %v1908 = vmul.f32 %v1308, %v1547
  %v1909 = vmul.f32 %v1309, %v1551
  %v1910 = vmul.f32 %v1310, %v1555
  %v1911 = vmul.f32 %v1311, %v1559
  %v1912 = vmul.f32 %v1312, %v1563
  %v1913 = vmul.f32 %v1313, %v1567
  %v1914 = vmul.f32 %v1314, %v1571
  %v1915 = vmul.f32 %v1315, %v1575
  %v1916 = vmul.f32 %v1316, %v1579
  %v1917 = vmul.f32 %v1317, %v1583
  %v1918 = vmul.f32 %v1318, %v1587
  %v1919 = vmul.f32 %v1319, %v1591
  %v1920 = vmul.f32 %v1320, %v1595
  %v1921 = vmul.f32 %v1321, %v1599
  %v1922 = vmul.f32 %v1322, %v1603
  %v1923 = vmul.f32 %v1323, %v1607
  %v1924 = vmul.f32 %v1324, %v1611
  %v1925 = vmul.f32 %v1325, %v1615
  %v1926 = vmul.f32 %v1326, %v1619
  %v1927 = vmul.f32 %v1327, %v1623
  %v1928 = vmul.f32 %v1328, %v1627
  %v1929 = vmul.f32 %v1329, %v1631
  %v1930 = vmul.f32 %v1330, %v1635
  %v1931 = vmul.f32 %v1331, %v1639
  %v1932 = vmul.f32 %v1332, %v1643
  %v1933 = vmul.f32 %v1333, %v1647
  %v1934 = vmul.f32 %v1334, %v1651
  %v1935 = vmul.f32 %v1335, %v1655
  %v1936 = vmul.f32 %v1336, %v1659
  %v1937 = vmul.f32 %v1337, %v1663
  %v1938 = vmul.f32 %v1338, %v1667
  %v1939 = vmul.f32 %v1339, %v1671
  %v1940 = vmul.f32 %v1340, %v1675
  %v1941 = vmul.f32 %v1341, %v1679
  %v1942 = vmul.f32 %v1342, %v1683
  %v1943 = vmul.f32 %v1343, %v1687
  %v1944 = vmul.f32 %v1344, %v1691
  %v1945 = vmul.f32 %v1345, %v1695
  %v1946 = vmul.f32 %v1346, %v1699
  %v1947 = vmul.f32 %v1347, %v1703
  %v1948 = vmul.f32 %v1348, %v1707
  %v1949 = vmul.f32 %v1349, %v1711
  %v1950 = vmul.f32 %v1350, %v1715
  %v1951 = vmul.f32 %v1351, %v1719
  %v1952 = vmul.f32 %v1352, %v1723
  %v1953 = vmul.f32 %v1353, %v1727
  %v1954 = vmul.f32 %v1354, %v1731
  %v1955 = vmul.f32 %v1355, %v1735
  %v1956 = vmul.f32 %v1356, %v1739
  %v1957 = vmul.f32 %v1357, %v1743
  %v1958 = vmul.f32 %v1358, %v1747
  %v1959 = vmul.f32 %v1359, %v1751
  %v1960 = vmul.f32 %v1360, %v1755
  %v1961 = vmul.f32 %v1361, %v1759
  %v1962 = vmul.f32 %v1362, %v1763
  %v1963 = vmul.f32 %v1363, %v1767
  %v1964 = vmul.f32 %v1364, %v1771
  %v1965 = vmul.f32 %v1365, %v1775
  %v1966 = vmul.f32 %v1366, %v1779
  %v1967 = vmul.f32 %v1367, %v1783
  %v1968 = vmul.f32 %v1368, %v1787
  %v1969 = vmul.f32 %v1369, %v1791
  %v1970 = vmul.f32 %v1370, %v1795
  %v1971 = vmul.f32 %v1371, %v1799
  %v1972 = vmul.f32 %v1372, %v1803
  %v1973 = vmul.f32 %v1373, %v1807
  %v1974 = vmul.f32 %v1374, %v1811
  %v1975 = vmul.f32 %v1375, %v1815
  %vm1976 = vcmask 1041408
  %v1977 = vsel %vm1976, %v1896, 0.0
  %v1978 = vsel %vm1976, %v1912, 0.0
  %v1979 = vadd.f32 %v1977, %v1978
  %v1980 = vsel %vm1976, %v1928, 0.0
  %v1981 = vadd.f32 %v1979, %v1980
  %v1982 = vsel %vm1976, %v1944, 0.0
  %v1983 = vadd.f32 %v1981, %v1982
  %v1984 = vsel %vm1976, %v1960, 0.0
  %v1985 = vadd.f32 %v1983, %v1984
  %v1986 = vsel %vm1976, %v1897, 0.0
  %v1987 = vsel %vm1976, %v1913, 0.0
  %v1988 = vadd.f32 %v1986, %v1987
  %v1989 = vsel %vm1976, %v1929, 0.0
  %v1990 = vadd.f32 %v1988, %v1989
  %v1991 = vsel %vm1976, %v1945, 0.0
  %v1992 = vadd.f32 %v1990, %v1991
  %v1993 = vsel %vm1976, %v1961, 0.0
  %v1994 = vadd.f32 %v1992, %v1993
  %v1995 = vsel %vm1976, %v1898, 0.0
  %v1996 = vsel %vm1976, %v1914, 0.0
  %v1997 = vadd.f32 %v1995, %v1996
  %v1998 = vsel %vm1976, %v1930, 0.0
  %v1999 = vadd.f32 %v1997, %v1998
  %v2000 = vsel %vm1976, %v1946, 0.0
  %v2001 = vadd.f32 %v1999, %v2000
  %v2002 = vsel %vm1976, %v1962, 0.0
  %v2003 = vadd.f32 %v2001, %v2002
  %v2004 = vsel %vm1976, %v1899, 0.0
  %v2005 = vsel %vm1976, %v1915, 0.0
  %v2006 = vadd.f32 %v2004, %v2005
  %v2007 = vsel %vm1976, %v1931, 0.0
  %v2008 = vadd.f32 %v2006, %v2007
  %v2009 = vsel %vm1976, %v1947, 0.0
  %v2010 = vadd.f32 %v2008, %v2009
  %v2011 = vsel %vm1976, %v1963, 0.0
  %v2012 = vadd.f32 %v2010, %v2011
  %v2013 = vsel %vm1976, %v1900, 0.0
  %v2014 = vsel %vm1976, %v1916, 0.0
  %v2015 = vadd.f32 %v2013, %v2014
  %v2016 = vsel %vm1976, %v1932, 0.0
  %v2017 = vadd.f32 %v2015, %v2016
  %v2018 = vsel %vm1976, %v1948, 0.0
  %v2019 = vadd.f32 %v2017, %v2018
  %v2020 = vsel %vm1976, %v1964, 0.0
  %v2021 = vadd.f32 %v2019, %v2020
  %v2022 = vsel %vm1976, %v1901, 0.0
  %v2023 = vsel %vm1976, %v1917, 0.0
  %v2024 = vadd.f32 %v2022, %v2023
  %v2025 = vsel %vm1976, %v1933, 0.0
  %v2026 = vadd.f32 %v2024, %v2025
  %v2027 = vsel %vm1976, %v1949, 0.0
  %v2028 = vadd.f32 %v2026, %v2027
  %v2029 = vsel %vm1976, %v1965, 0.0
  %v2030 = vadd.f32 %v2028, %v2029
  %v2031 = vsel %vm1976, %v1902, 0.0
  %v2032 = vsel %vm1976, %v1918, 0.0
  %v2033 = vadd.f32 %v2031, %v2032
  %v2034 = vsel %vm1976, %v1934, 0.0
  %v2035 = vadd.f32 %v2033, %v2034
  %v2036 = vsel %vm1976, %v1950, 0.0
  %v2037 = vadd.f32 %v2035, %v2036
  %v2038 = vsel %vm1976, %v1966, 0.0
  %v2039 = vadd.f32 %v2037, %v2038
  %v2040 = vsel %vm1976, %v1903, 0.0
  %v2041 = vsel %vm1976, %v1919, 0.0
  %v2042 = vadd.f32 %v2040, %v2041
  %v2043 = vsel %vm1976, %v1935, 0.0
  %v2044 = vadd.f32 %v2042, %v2043
  %v2045 = vsel %vm1976, %v1951, 0.0
  %v2046 = vadd.f32 %v2044, %v2045
  %v2047 = vsel %vm1976, %v1967, 0.0
  %v2048 = vadd.f32 %v2046, %v2047
  %v2049 = vsel %vm1976, %v1904, 0.0
  %v2050 = vsel %vm1976, %v1920, 0.0
  %v2051 = vadd.f32 %v2049, %v2050
  %v2052 = vsel %vm1976, %v1936, 0.0
  %v2053 = vadd.f32 %v2051, %v2052
  %v2054 = vsel %vm1976, %v1952, 0.0
  %v2055 = vadd.f32 %v2053, %v2054
  %v2056 = vsel %vm1976, %v1968, 0.0
  %v2057 = vadd.f32 %v2055, %v2056
  %v2058 = vsel %vm1976, %v1905, 0.0
  %v2059 = vsel %vm1976, %v1921, 0.0
  %v2060 = vadd.f32 %v2058, %v2059
  %v2061 = vsel %vm1976, %v1937, 0.0
  %v2062 = vadd.f32 %v2060, %v2061
  %v2063 = vsel %vm1976, %v1953, 0.0
  %v2064 = vadd.f32 %v2062, %v2063
  %v2065 = vsel %vm1976, %v1969, 0.0
  %v2066 = vadd.f32 %v2064, %v2065
  %v2067 = vsel %vm1976, %v1906, 0.0
  %v2068 = vsel %vm1976, %v1922, 0.0
  %v2069 = vadd.f32 %v2067, %v2068
  %v2070 = vsel %vm1976, %v1938, 0.0
  %v2071 = vadd.f32 %v2069, %v2070
  %v2072 = vsel %vm1976, %v1954, 0.0
  %v2073 = vadd.f32 %v2071, %v2072
  %v2074 = vsel %vm1976, %v1970, 0.0
  %v2075 = vadd.f32 %v2073, %v2074
  %v2076 = vsel %vm1976, %v1907, 0.0
  %v2077 = vsel %vm1976, %v1923, 0.0
  %v2078 = vadd.f32 %v2076, %v2077
  %v2079 = vsel %vm1976, %v1939, 0.0
  %v2080 = vadd.f32 %v2078, %v2079
  %v2081 = vsel %vm1976, %v1955, 0.0
  %v2082 = vadd.f32 %v2080, %v2081
  %v2083 = vsel %vm1976, %v1971, 0.0
  %v2084 = vadd.f32 %v2082, %v2083
  %v2085 = vsel %vm1976, %v1908, 0.0
  %v2086 = vsel %vm1976, %v1924, 0.0
  %v2087 = vadd.f32 %v2085, %v2086
  %v2088 = vsel %vm1976, %v1940, 0.0
  %v2089 = vadd.f32 %v2087, %v2088
  %v2090 = vsel %vm1976, %v1956, 0.0
  %v2091 = vadd.f32 %v2089, %v2090
  %v2092 = vsel %vm1976, %v1972, 0.0
  %v2093 = vadd.f32 %v2091, %v2092
  %v2094 = vsel %vm1976, %v1909, 0.0
  %v2095 = vsel %vm1976, %v1925, 0.0
  %v2096 = vadd.f32 %v2094, %v2095
  %v2097 = vsel %vm1976, %v1941, 0.0
  %v2098 = vadd.f32 %v2096, %v2097
  %v2099 = vsel %vm1976, %v1957, 0.0
  %v2100 = vadd.f32 %v2098, %v2099
  %v2101 = vsel %vm1976, %v1973, 0.0
  %v2102 = vadd.f32 %v2100, %v2101
  %v2103 = vsel %vm1976, %v1910, 0.0
  %v2104 = vsel %vm1976, %v1926, 0.0
  %v2105 = vadd.f32 %v2103, %v2104
  %v2106 = vsel %vm1976, %v1942, 0.0
  %v2107 = vadd.f32 %v2105, %v2106
  %v2108 = vsel %vm1976, %v1958, 0.0
  %v2109 = vadd.f32 %v2107, %v2108
  %v2110 = vsel %vm1976, %v1974, 0.0
  %v2111 = vadd.f32 %v2109, %v2110
  %v2112 = vsel %vm1976, %v1911, 0.0
  %v2113 = vsel %vm1976, %v1927, 0.0
  %v2114 = vadd.f32 %v2112, %v2113
  %v2115 = vsel %vm1976, %v1943, 0.0
  %v2116 = vadd.f32 %v2114, %v2115
  %v2117 = vsel %vm1976, %v1959, 0.0
  %v2118 = vadd.f32 %v2116, %v2117
  %v2119 = vsel %vm1976, %v1975, 0.0
  %v2120 = vadd.f32 %v2118, %v2119
  %v2121 = vadd.f32 %v1460, %v1985
  %v2122 = vadd.f32 %v1461, %v1994
  %v2123 = vadd.f32 %v1462, %v2003
  %v2124 = vadd.f32 %v1463, %v2012
  %v2125 = vadd.f32 %v1464, %v2021
  %v2126 = vadd.f32 %v1465, %v2030
  %v2127 = vadd.f32 %v1466, %v2039
  %v2128 = vadd.f32 %v1467, %v2048
  %v2129 = vadd.f32 %v1468, %v2057
  %v2130 = vadd.f32 %v1469, %v2066
  %v2131 = vadd.f32 %v1470, %v2075
  %v2132 = vadd.f32 %v1471, %v2084
  %v2133 = vadd.f32 %v1472, %v2093
  %v2134 = vadd.f32 %v1473, %v2102
  %v2135 = vadd.f32 %v1474, %v2111
  %v2136 = vadd.f32 %v1475, %v2120
  %v2137 = vsel %vm1976, %v2121, 0.0
  %v2138 = vsel %vm1976, %v2122, 0.0
  %v2139 = vadd.f32 %v2137, %v2138
  %v2140 = vsel %vm1976, %v2123, 0.0
  %v2141 = vadd.f32 %v2139, %v2140
  %v2142 = vsel %vm1976, %v2124, 0.0
  %v2143 = vadd.f32 %v2141, %v2142
  %v2144 = vsel %vm1976, %v2125, 0.0
  %v2145 = vadd.f32 %v2143, %v2144
  %v2146 = vsel %vm1976, %v2126, 0.0
  %v2147 = vadd.f32 %v2145, %v2146
  %v2148 = vsel %vm1976, %v2127, 0.0
  %v2149 = vadd.f32 %v2147, %v2148
  %v2150 = vsel %vm1976, %v2128, 0.0
  %v2151 = vadd.f32 %v2149, %v2150
  %v2152 = vsel %vm1976, %v2129, 0.0
  %v2153 = vadd.f32 %v2151, %v2152
  %v2154 = vsel %vm1976, %v2130, 0.0
  %v2155 = vadd.f32 %v2153, %v2154
  %v2156 = vsel %vm1976, %v2131, 0.0
  %v2157 = vadd.f32 %v2155, %v2156
  %v2158 = vsel %vm1976, %v2132, 0.0
  %v2159 = vadd.f32 %v2157, %v2158
  %v2160 = vsel %vm1976, %v2133, 0.0
  %v2161 = vadd.f32 %v2159, %v2160
  %v2162 = vsel %vm1976, %v2134, 0.0
  %v2163 = vadd.f32 %v2161, %v2162
  %v2164 = vsel %vm1976, %v2135, 0.0
  %v2165 = vadd.f32 %v2163, %v2164
  %v2166 = vsel %vm1976, %v2136, 0.0
  %v2167 = vadd.f32 %v2165, %v2166
  %2168 = vadd.xlane.f32.xlu0 %v2167
  %v2169 = vpop.xlane.xlu0 %2168
  %v2170 = vld [vmem:[#allocation2] sm:$0x1]
  %v2172 = vlaneseq
  %v2173 = vshrl.u32 %v2172, 7
  %v2174 = vsub.s32 0, %v2173
  %v2175 = vrot.slane %v2170, %v2174
  %v2177 = vadd.f32 %v2169, %v2175
  %vm2178 = vcmask 1024
  %2179 = vst.msk [vmem:[%s9] sm:$0x3] %vm2178, %v2177
  // Predicated region
  $region38: #{wrm_forward_eval.1} parent=0 // pred_check
    _
  $region39: #{wrm_forward_eval.1} parent=0 // pred_check_branch
    %2181 = sbr.rel (0) target = $region41
  $region40: #{wrm_forward_eval.1} parent=0 // pred_region
    _
  $region41: #{wrm_forward_eval.1} parent=0 // pred_fallthru
    _
  // Predicated region
  $region42: #{wrm_forward_eval.1} parent=0 // pred_check
    _
  $region43: #{wrm_forward_eval.1} parent=0 // pred_check_branch
    %2183 = sbr.rel (0) target = $region45
  $region44: #{wrm_forward_eval.1} parent=0 // pred_region
    _
  $region45: #{wrm_forward_eval.1} parent=0 // pred_fallthru
    _

</llo_original>
